<compile_context>
chip_gen: v6e
topology: v6e:2x2x1
jax: 0.10.0
libtpu: 0.0.40
codegen_flags: <defaults>
</compile_context>

<pallas_src>
import math
import functools

import jax
import jax.numpy as jnp
from jax.experimental import pallas as pl
from jax.experimental.pallas import tpu as pltpu


def sdpa_kernel(q_ref, k_ref, v_ref,
                wq_ref, bq_ref, wk_ref, bk_ref, wv_ref, bv_ref,
                wo_ref, bo_ref, o_ref, *, h, d_k, d_v):
    """One batch tile per grid step: fused projections + per-head attention +
    single fused output projection."""
    b_tile, nq, d_model = q_ref.shape
    nk = k_ref.shape[1]
    d_out_pad = o_ref.shape[-1]

    # Flatten batch into rows so projection matmuls see M = b_tile * seq.
    q_in = q_ref[...].reshape(b_tile * nq, d_model)
    k_in = k_ref[...].reshape(b_tile * nk, d_model)
    v_in = v_ref[...].reshape(b_tile * nk, d_model)

    # Fused projections: one matmul each (N = h*d_k / h*d_v), not per head.
    q_all = jnp.dot(q_in, wq_ref[...], preferred_element_type=jnp.float32) + bq_ref[0]
    k_all = jnp.dot(k_in, wk_ref[...], preferred_element_type=jnp.float32) + bk_ref[0]
    v_all = jnp.dot(v_in, wv_ref[...], preferred_element_type=jnp.float32) + bv_ref[0]

    scale = 1.0 / math.sqrt(d_k)

    # Static Python loops (small b_tile, h): all slices are static.
    batch_rows = []
    for b in range(b_tile):
        q_b = q_all[b * nq:(b + 1) * nq, :]
        k_b = k_all[b * nk:(b + 1) * nk, :]
        v_b = v_all[b * nk:(b + 1) * nk, :]
        head_outs = []
        for hi in range(h):
            q_h = q_b[:, hi * d_k:(hi + 1) * d_k]          # (nq, d_k)
            k_h = k_b[:, hi * d_k:(hi + 1) * d_k]          # (nk, d_k)
            v_h = v_b[:, hi * d_v:(hi + 1) * d_v]          # (nk, d_v)

            att = jnp.dot(q_h, k_h.T, preferred_element_type=jnp.float32) * scale
            att = att - jnp.max(att, axis=-1, keepdims=True)
            p = jnp.exp(att)
            denom = jnp.sum(p, axis=-1, keepdims=True)     # (nq, 1)
            inv = pl.reciprocal(denom, approx=True)        # EUP slot (free-ish)
            # Fold the normalization into the small (nq, d_v) result.
            # TODO(synk): nn.Dropout(0.1) omitted — inference semantics (identity).
            # TODO(synk): attention_mask / attention_weights optional args not implemented.
            head_outs.append(
                jnp.dot(p, v_h, preferred_element_type=jnp.float32) * inv)
        batch_rows.append(jnp.concatenate(head_outs, axis=-1))   # (nq, h*d_v)

    concat = jnp.concatenate(batch_rows, axis=0)                  # (b_tile*nq, h*d_v)

    # Single fused output projection; wo/bo are pre-padded to a lane-dense
    # (multiple-of-128) output width, so this store is an unmasked vst.
    out = jnp.dot(concat, wo_ref[...], preferred_element_type=jnp.float32) + bo_ref[0]
    o_ref[...] = out.reshape(b_tile, nq, d_out_pad).astype(o_ref.dtype)


def scaled_dot_product_attention(queries, keys, values, params, *,
                                 h, d_k, d_v, b_tile=None):
    b_s, nq, d_model = queries.shape
    nk = keys.shape[1]
    wq, bq, wk, bk, wv, bv, wo, bo = params

    if b_tile is None:
        b_tile = b_s                      # whole batch in one grid step for tiny b_s
    assert b_s % b_tile == 0, "b_s must be divisible by b_tile"

    # Lane-dense output: pad fc_o to a 128-multiple output width with zeros.
    d_out_pad = ((d_model + 127) // 128) * 128
    wo_p = jnp.zeros((wo.shape[0], d_out_pad), wo.dtype).at[:, :d_model].set(wo)
    bo_p = jnp.zeros((1, d_out_pad), bo.dtype).at[:, :d_model].set(bo.reshape(1, -1))

    # Biases as (1, dim) so they map onto (sublane, lane) cleanly.
    bq2 = bq.reshape(1, -1)
    bk2 = bk.reshape(1, -1)
    bv2 = bv.reshape(1, -1)

    kernel = functools.partial(sdpa_kernel, h=h, d_k=d_k, d_v=d_v)

    def full_spec(arr):
        n = arr.ndim
        return pl.BlockSpec(arr.shape, lambda b, n=n: (0,) * n)

    out_padded = pl.pallas_call(
        kernel,
        out_shape=jax.ShapeDtypeStruct((b_s, nq, d_out_pad), queries.dtype),
        grid=(b_s // b_tile,),
        in_specs=[
            pl.BlockSpec((b_tile, nq, d_model), lambda b: (b, 0, 0)),  # queries
            pl.BlockSpec((b_tile, nk, d_model), lambda b: (b, 0, 0)),  # keys
            pl.BlockSpec((b_tile, nk, d_model), lambda b: (b, 0, 0)),  # values
            full_spec(wq), full_spec(bq2),
            full_spec(wk), full_spec(bk2),
            full_spec(wv), full_spec(bv2),
            full_spec(wo_p), full_spec(bo_p),
        ],
        out_specs=pl.BlockSpec((b_tile, nq, d_out_pad), lambda b: (b, 0, 0)),
        compiler_params=pltpu.CompilerParams(dimension_semantics=("parallel",)),
    )(queries, keys, values, wq, bq2, wk, bk2, wv, bv2, wo_p, bo_p)

    return out_padded[..., :d_model]


def init_params(key, d_model, d_k, d_v, h):
    """Matches the PyTorch init: Linear weight ~ N(0, 0.001^2), bias = 0.
    Weights stored in (in, out) layout."""
    k1, k2, k3, k4 = jax.random.split(key, 4)
    wq = 0.001 * jax.random.normal(k1, (d_model, h * d_k), jnp.float32)
    wk = 0.001 * jax.random.normal(k2, (d_model, h * d_k), jnp.float32)
    wv = 0.001 * jax.random.normal(k3, (d_model, h * d_v), jnp.float32)
    wo = 0.001 * jax.random.normal(k4, (h * d_v, d_model), jnp.float32)
    bq = jnp.zeros((h * d_k,), jnp.float32)
    bk = jnp.zeros((h * d_k,), jnp.float32)
    bv = jnp.zeros((h * d_v,), jnp.float32)
    bo = jnp.zeros((d_model,), jnp.float32)
    return (wq, bq, wk, bk, wv, bv, wo, bo)


def reference_attention(queries, keys, values, params, *, h, d_k, d_v):
    """Pure-JAX replica of the PyTorch forward (dropout as identity)."""
    wq, bq, wk, bk, wv, bv, wo, bo = params
    b_s, nq, _ = queries.shape
    nk = keys.shape[1]
    q = (queries @ wq + bq).reshape(b_s, nq, h, d_k).transpose(0, 2, 1, 3)
    k = (keys @ wk + bk).reshape(b_s, nk, h, d_k).transpose(0, 2, 3, 1)
    v = (values @ wv + bv).reshape(b_s, nk, h, d_v).transpose(0, 2, 1, 3)
    att = jnp.matmul(q, k) / math.sqrt(d_k)
    att = jax.nn.softmax(att, axis=-1)
    out = jnp.matmul(att, v).transpose(0, 2, 1, 3).reshape(b_s, nq, h * d_v)
    return out @ wo + bo


if __name__ == "__main__":
    d_model, d_k, d_v, h = 32, 16, 16, 4
    b_s, nq, nk = 2, 8, 8

    key = jax.random.PRNGKey(0)
    kq, kk, kv, kp = jax.random.split(key, 4)
    queries = jax.random.normal(kq, (b_s, nq, d_model), jnp.float32)
    keys = jax.random.normal(kk, (b_s, nk, d_model), jnp.float32)
    values = jax.random.normal(kv, (b_s, nk, d_model), jnp.float32)
    params = init_params(kp, d_model, d_k, d_v, h)

    out = scaled_dot_product_attention(queries, keys, values, params,
                                       h=h, d_k=d_k, d_v=d_v)
    out = jax.block_until_ready(out)

    ref = reference_attention(queries, keys, values, params, h=h, d_k=d_k, d_v=d_v)
    assert out.shape == (b_s, nq, d_model)
    # Slightly relaxed relative tolerance: pl.reciprocal(approx=True) in the
    # softmax normalization is an EUP approximation (outputs are ~1e-5 here).
    assert jnp.allclose(out, ref, atol=1e-8, rtol=5e-3), "mismatch vs reference"

    print("KERNEL_OK")
</pallas_src>

<mosaic_0001>
module attributes {stable_mosaic.version = 11 : i64} {
  func.func @sdpa_kernel(%arg0: i32, %arg1: memref<2x8x32xf32, #tpu.memory_space<vmem>>, %arg2: memref<2x8x32xf32, #tpu.memory_space<vmem>>, %arg3: memref<2x8x32xf32, #tpu.memory_space<vmem>>, %arg4: memref<32x64xf32, #tpu.memory_space<vmem>>, %arg5: memref<1x64xf32, #tpu.memory_space<vmem>>, %arg6: memref<32x64xf32, #tpu.memory_space<vmem>>, %arg7: memref<1x64xf32, #tpu.memory_space<vmem>>, %arg8: memref<32x64xf32, #tpu.memory_space<vmem>>, %arg9: memref<1x64xf32, #tpu.memory_space<vmem>>, %arg10: memref<64x128xf32, #tpu.memory_space<vmem>>, %arg11: memref<1x128xf32, #tpu.memory_space<vmem>>, %arg12: memref<2x8x128xf32, #tpu.memory_space<vmem>>) attributes {dimension_semantics = [#tpu.dimension_semantics<parallel>], iteration_bounds = array<i64: 1>, scalar_prefetch = 0 : i64, scratch_operands = 0 : i64, tpu.core_type = #tpu.core_type<tc>, window_params = [{transform_indices = @transform_0, window_bounds = array<i64: 2, 8, 32>}, {transform_indices = @transform_1, window_bounds = array<i64: 2, 8, 32>}, {transform_indices = @transform_2, window_bounds = array<i64: 2, 8, 32>}, {pipeline_mode = #tpu.pipeline_mode<synchronous>, transform_indices = @transform_3, window_bounds = array<i64: 32, 64>}, {pipeline_mode = #tpu.pipeline_mode<synchronous>, transform_indices = @transform_4, window_bounds = array<i64: 1, 64>}, {pipeline_mode = #tpu.pipeline_mode<synchronous>, transform_indices = @transform_5, window_bounds = array<i64: 32, 64>}, {pipeline_mode = #tpu.pipeline_mode<synchronous>, transform_indices = @transform_6, window_bounds = array<i64: 1, 64>}, {pipeline_mode = #tpu.pipeline_mode<synchronous>, transform_indices = @transform_7, window_bounds = array<i64: 32, 64>}, {pipeline_mode = #tpu.pipeline_mode<synchronous>, transform_indices = @transform_8, window_bounds = array<i64: 1, 64>}, {pipeline_mode = #tpu.pipeline_mode<synchronous>, transform_indices = @transform_9, window_bounds = array<i64: 64, 128>}, {pipeline_mode = #tpu.pipeline_mode<synchronous>, transform_indices = @transform_10, window_bounds = array<i64: 1, 128>}, {transform_indices = @transform_11, window_bounds = array<i64: 2, 8, 128>}]} {
    %c0 = arith.constant 0 : index
    %c0_0 = arith.constant 0 : index
    %c0_1 = arith.constant 0 : index
    %0 = vector.load %arg1[%c0, %c0_0, %c0_1] : memref<2x8x32xf32, #tpu.memory_space<vmem>>, vector<2x8x32xf32>
    %1 = vector.shape_cast %0 : vector<2x8x32xf32> to vector<16x32xf32>
    %c0_2 = arith.constant 0 : index
    %c0_3 = arith.constant 0 : index
    %c0_4 = arith.constant 0 : index
    %2 = vector.load %arg2[%c0_2, %c0_3, %c0_4] : memref<2x8x32xf32, #tpu.memory_space<vmem>>, vector<2x8x32xf32>
    %3 = vector.shape_cast %2 : vector<2x8x32xf32> to vector<16x32xf32>
    %c0_5 = arith.constant 0 : index
    %c0_6 = arith.constant 0 : index
    %c0_7 = arith.constant 0 : index
    %4 = vector.load %arg3[%c0_5, %c0_6, %c0_7] : memref<2x8x32xf32, #tpu.memory_space<vmem>>, vector<2x8x32xf32>
    %5 = vector.shape_cast %4 : vector<2x8x32xf32> to vector<16x32xf32>
    %c0_8 = arith.constant 0 : index
    %c0_9 = arith.constant 0 : index
    %6 = vector.load %arg4[%c0_8, %c0_9] : memref<32x64xf32, #tpu.memory_space<vmem>>, vector<32x64xf32>
    %cst = arith.constant dense<0.000000e+00> : vector<16x64xf32>
    %7 = tpu.matmul %1, %6, %cst {dimension_numbers = #tpu.dot_dimension_numbers<[1], [0], [0], [1], [0, 0, 1, 1], [], []>} : vector<16x32xf32>, vector<32x64xf32>, vector<16x64xf32> -> vector<16x64xf32>
    %c0_10 = arith.constant 0 : index
    %c0_11 = arith.constant 0 : index
    %8 = vector.load %arg5[%c0_10, %c0_11] : memref<1x64xf32, #tpu.memory_space<vmem>>, vector<1x64xf32>
    %9 = vector.shape_cast %8 : vector<1x64xf32> to vector<64xf32>
    %10 = vector.shape_cast %9 : vector<64xf32> to vector<1x64xf32>
    %11 = vector.broadcast %10 : vector<1x64xf32> to vector<16x64xf32>
    %12 = arith.addf %7, %11 : vector<16x64xf32>
    %c0_12 = arith.constant 0 : index
    %c0_13 = arith.constant 0 : index
    %13 = vector.load %arg6[%c0_12, %c0_13] : memref<32x64xf32, #tpu.memory_space<vmem>>, vector<32x64xf32>
    %cst_14 = arith.constant dense<0.000000e+00> : vector<16x64xf32>
    %14 = tpu.matmul %3, %13, %cst_14 {dimension_numbers = #tpu.dot_dimension_numbers<[1], [0], [0], [1], [0, 0, 1, 1], [], []>} : vector<16x32xf32>, vector<32x64xf32>, vector<16x64xf32> -> vector<16x64xf32>
    %c0_15 = arith.constant 0 : index
    %c0_16 = arith.constant 0 : index
    %15 = vector.load %arg7[%c0_15, %c0_16] : memref<1x64xf32, #tpu.memory_space<vmem>>, vector<1x64xf32>
    %16 = vector.shape_cast %15 : vector<1x64xf32> to vector<64xf32>
    %17 = vector.shape_cast %16 : vector<64xf32> to vector<1x64xf32>
    %18 = vector.broadcast %17 : vector<1x64xf32> to vector<16x64xf32>
    %19 = arith.addf %14, %18 : vector<16x64xf32>
    %c0_17 = arith.constant 0 : index
    %c0_18 = arith.constant 0 : index
    %20 = vector.load %arg8[%c0_17, %c0_18] : memref<32x64xf32, #tpu.memory_space<vmem>>, vector<32x64xf32>
    %cst_19 = arith.constant dense<0.000000e+00> : vector<16x64xf32>
    %21 = tpu.matmul %5, %20, %cst_19 {dimension_numbers = #tpu.dot_dimension_numbers<[1], [0], [0], [1], [0, 0, 1, 1], [], []>} : vector<16x32xf32>, vector<32x64xf32>, vector<16x64xf32> -> vector<16x64xf32>
    %c0_20 = arith.constant 0 : index
    %c0_21 = arith.constant 0 : index
    %22 = vector.load %arg9[%c0_20, %c0_21] : memref<1x64xf32, #tpu.memory_space<vmem>>, vector<1x64xf32>
    %23 = vector.shape_cast %22 : vector<1x64xf32> to vector<64xf32>
    %24 = vector.shape_cast %23 : vector<64xf32> to vector<1x64xf32>
    %25 = vector.broadcast %24 : vector<1x64xf32> to vector<16x64xf32>
    %26 = arith.addf %21, %25 : vector<16x64xf32>
    %27 = vector.extract_strided_slice %12 {offsets = [0, 0], sizes = [8, 64], strides = [1, 1]} : vector<16x64xf32> to vector<8x64xf32>
    %28 = vector.extract_strided_slice %19 {offsets = [0, 0], sizes = [8, 64], strides = [1, 1]} : vector<16x64xf32> to vector<8x64xf32>
    %29 = vector.extract_strided_slice %26 {offsets = [0, 0], sizes = [8, 64], strides = [1, 1]} : vector<16x64xf32> to vector<8x64xf32>
    %30 = vector.extract_strided_slice %27 {offsets = [0, 0], sizes = [8, 16], strides = [1, 1]} : vector<8x64xf32> to vector<8x16xf32>
    %31 = vector.extract_strided_slice %28 {offsets = [0, 0], sizes = [8, 16], strides = [1, 1]} : vector<8x64xf32> to vector<8x16xf32>
    %32 = vector.extract_strided_slice %29 {offsets = [0, 0], sizes = [8, 16], strides = [1, 1]} : vector<8x64xf32> to vector<8x16xf32>
    %33 = tpu.transpose %31, [1, 0] : vector<8x16xf32> -> vector<16x8xf32>
    %cst_22 = arith.constant dense<0.000000e+00> : vector<8x8xf32>
    %34 = tpu.matmul %30, %33, %cst_22 {dimension_numbers = #tpu.dot_dimension_numbers<[1], [0], [0], [1], [0, 0, 1, 1], [], []>} : vector<8x16xf32>, vector<16x8xf32>, vector<8x8xf32> -> vector<8x8xf32>
    %cst_23 = arith.constant 2.500000e-01 : f32
    %35 = vector.broadcast %cst_23 : f32 to vector<8x8xf32>
    %36 = arith.mulf %34, %35 : vector<8x8xf32>
    %cst_24 = arith.constant dense<0xFF800000> : vector<8xf32>
    %37 = vector.multi_reduction <maximumf>, %36, %cst_24 [1] : vector<8x8xf32> to vector<8xf32>
    %38 = vector.shape_cast %37 : vector<8xf32> to vector<8x1xf32>
    %39 = vector.broadcast %38 : vector<8x1xf32> to vector<8x8xf32>
    %40 = arith.subf %36, %39 : vector<8x8xf32>
    %41 = math.exp %40 : vector<8x8xf32>
    %cst_25 = arith.constant dense<0.000000e+00> : vector<8xf32>
    %42 = vector.multi_reduction <add>, %41, %cst_25 [1] : vector<8x8xf32> to vector<8xf32>
    %43 = vector.shape_cast %42 : vector<8xf32> to vector<8x1xf32>
    %44 = tpu.reciprocal %43 {approx = true} : vector<8x1xf32> -> vector<8x1xf32>
    %cst_26 = arith.constant dense<0.000000e+00> : vector<8x16xf32>
    %45 = tpu.matmul %41, %32, %cst_26 {dimension_numbers = #tpu.dot_dimension_numbers<[1], [0], [0], [1], [0, 0, 1, 1], [], []>} : vector<8x8xf32>, vector<8x16xf32>, vector<8x16xf32> -> vector<8x16xf32>
    %46 = vector.broadcast %44 : vector<8x1xf32> to vector<8x16xf32>
    %47 = arith.mulf %45, %46 : vector<8x16xf32>
    %48 = vector.extract_strided_slice %27 {offsets = [0, 16], sizes = [8, 16], strides = [1, 1]} : vector<8x64xf32> to vector<8x16xf32>
    %49 = vector.extract_strided_slice %28 {offsets = [0, 16], sizes = [8, 16], strides = [1, 1]} : vector<8x64xf32> to vector<8x16xf32>
    %50 = vector.extract_strided_slice %29 {offsets = [0, 16], sizes = [8, 16], strides = [1, 1]} : vector<8x64xf32> to vector<8x16xf32>
    %51 = tpu.transpose %49, [1, 0] : vector<8x16xf32> -> vector<16x8xf32>
    %cst_27 = arith.constant dense<0.000000e+00> : vector<8x8xf32>
    %52 = tpu.matmul %48, %51, %cst_27 {dimension_numbers = #tpu.dot_dimension_numbers<[1], [0], [0], [1], [0, 0, 1, 1], [], []>} : vector<8x16xf32>, vector<16x8xf32>, vector<8x8xf32> -> vector<8x8xf32>
    %cst_28 = arith.constant 2.500000e-01 : f32
    %53 = vector.broadcast %cst_28 : f32 to vector<8x8xf32>
    %54 = arith.mulf %52, %53 : vector<8x8xf32>
    %cst_29 = arith.constant dense<0xFF800000> : vector<8xf32>
    %55 = vector.multi_reduction <maximumf>, %54, %cst_29 [1] : vector<8x8xf32> to vector<8xf32>
    %56 = vector.shape_cast %55 : vector<8xf32> to vector<8x1xf32>
    %57 = vector.broadcast %56 : vector<8x1xf32> to vector<8x8xf32>
    %58 = arith.subf %54, %57 : vector<8x8xf32>
    %59 = math.exp %58 : vector<8x8xf32>
    %cst_30 = arith.constant dense<0.000000e+00> : vector<8xf32>
    %60 = vector.multi_reduction <add>, %59, %cst_30 [1] : vector<8x8xf32> to vector<8xf32>
    %61 = vector.shape_cast %60 : vector<8xf32> to vector<8x1xf32>
    %62 = tpu.reciprocal %61 {approx = true} : vector<8x1xf32> -> vector<8x1xf32>
    %cst_31 = arith.constant dense<0.000000e+00> : vector<8x16xf32>
    %63 = tpu.matmul %59, %50, %cst_31 {dimension_numbers = #tpu.dot_dimension_numbers<[1], [0], [0], [1], [0, 0, 1, 1], [], []>} : vector<8x8xf32>, vector<8x16xf32>, vector<8x16xf32> -> vector<8x16xf32>
    %64 = vector.broadcast %62 : vector<8x1xf32> to vector<8x16xf32>
    %65 = arith.mulf %63, %64 : vector<8x16xf32>
    %66 = vector.extract_strided_slice %27 {offsets = [0, 32], sizes = [8, 16], strides = [1, 1]} : vector<8x64xf32> to vector<8x16xf32>
    %67 = vector.extract_strided_slice %28 {offsets = [0, 32], sizes = [8, 16], strides = [1, 1]} : vector<8x64xf32> to vector<8x16xf32>
    %68 = vector.extract_strided_slice %29 {offsets = [0, 32], sizes = [8, 16], strides = [1, 1]} : vector<8x64xf32> to vector<8x16xf32>
    %69 = tpu.transpose %67, [1, 0] : vector<8x16xf32> -> vector<16x8xf32>
    %cst_32 = arith.constant dense<0.000000e+00> : vector<8x8xf32>
    %70 = tpu.matmul %66, %69, %cst_32 {dimension_numbers = #tpu.dot_dimension_numbers<[1], [0], [0], [1], [0, 0, 1, 1], [], []>} : vector<8x16xf32>, vector<16x8xf32>, vector<8x8xf32> -> vector<8x8xf32>
    %cst_33 = arith.constant 2.500000e-01 : f32
    %71 = vector.broadcast %cst_33 : f32 to vector<8x8xf32>
    %72 = arith.mulf %70, %71 : vector<8x8xf32>
    %cst_34 = arith.constant dense<0xFF800000> : vector<8xf32>
    %73 = vector.multi_reduction <maximumf>, %72, %cst_34 [1] : vector<8x8xf32> to vector<8xf32>
    %74 = vector.shape_cast %73 : vector<8xf32> to vector<8x1xf32>
    %75 = vector.broadcast %74 : vector<8x1xf32> to vector<8x8xf32>
    %76 = arith.subf %72, %75 : vector<8x8xf32>
    %77 = math.exp %76 : vector<8x8xf32>
    %cst_35 = arith.constant dense<0.000000e+00> : vector<8xf32>
    %78 = vector.multi_reduction <add>, %77, %cst_35 [1] : vector<8x8xf32> to vector<8xf32>
    %79 = vector.shape_cast %78 : vector<8xf32> to vector<8x1xf32>
    %80 = tpu.reciprocal %79 {approx = true} : vector<8x1xf32> -> vector<8x1xf32>
    %cst_36 = arith.constant dense<0.000000e+00> : vector<8x16xf32>
    %81 = tpu.matmul %77, %68, %cst_36 {dimension_numbers = #tpu.dot_dimension_numbers<[1], [0], [0], [1], [0, 0, 1, 1], [], []>} : vector<8x8xf32>, vector<8x16xf32>, vector<8x16xf32> -> vector<8x16xf32>
    %82 = vector.broadcast %80 : vector<8x1xf32> to vector<8x16xf32>
    %83 = arith.mulf %81, %82 : vector<8x16xf32>
    %84 = vector.extract_strided_slice %27 {offsets = [0, 48], sizes = [8, 16], strides = [1, 1]} : vector<8x64xf32> to vector<8x16xf32>
    %85 = vector.extract_strided_slice %28 {offsets = [0, 48], sizes = [8, 16], strides = [1, 1]} : vector<8x64xf32> to vector<8x16xf32>
    %86 = vector.extract_strided_slice %29 {offsets = [0, 48], sizes = [8, 16], strides = [1, 1]} : vector<8x64xf32> to vector<8x16xf32>
    %87 = tpu.transpose %85, [1, 0] : vector<8x16xf32> -> vector<16x8xf32>
    %cst_37 = arith.constant dense<0.000000e+00> : vector<8x8xf32>
    %88 = tpu.matmul %84, %87, %cst_37 {dimension_numbers = #tpu.dot_dimension_numbers<[1], [0], [0], [1], [0, 0, 1, 1], [], []>} : vector<8x16xf32>, vector<16x8xf32>, vector<8x8xf32> -> vector<8x8xf32>
    %cst_38 = arith.constant 2.500000e-01 : f32
    %89 = vector.broadcast %cst_38 : f32 to vector<8x8xf32>
    %90 = arith.mulf %88, %89 : vector<8x8xf32>
    %cst_39 = arith.constant dense<0xFF800000> : vector<8xf32>
    %91 = vector.multi_reduction <maximumf>, %90, %cst_39 [1] : vector<8x8xf32> to vector<8xf32>
    %92 = vector.shape_cast %91 : vector<8xf32> to vector<8x1xf32>
    %93 = vector.broadcast %92 : vector<8x1xf32> to vector<8x8xf32>
    %94 = arith.subf %90, %93 : vector<8x8xf32>
    %95 = math.exp %94 : vector<8x8xf32>
    %cst_40 = arith.constant dense<0.000000e+00> : vector<8xf32>
    %96 = vector.multi_reduction <add>, %95, %cst_40 [1] : vector<8x8xf32> to vector<8xf32>
    %97 = vector.shape_cast %96 : vector<8xf32> to vector<8x1xf32>
    %98 = tpu.reciprocal %97 {approx = true} : vector<8x1xf32> -> vector<8x1xf32>
    %cst_41 = arith.constant dense<0.000000e+00> : vector<8x16xf32>
    %99 = tpu.matmul %95, %86, %cst_41 {dimension_numbers = #tpu.dot_dimension_numbers<[1], [0], [0], [1], [0, 0, 1, 1], [], []>} : vector<8x8xf32>, vector<8x16xf32>, vector<8x16xf32> -> vector<8x16xf32>
    %100 = vector.broadcast %98 : vector<8x1xf32> to vector<8x16xf32>
    %101 = arith.mulf %99, %100 : vector<8x16xf32>
    %102 = tpu.concatenate %47, %65, %83, %101 in 1 : vector<8x16xf32>, vector<8x16xf32>, vector<8x16xf32>, vector<8x16xf32> -> vector<8x64xf32>
    %103 = vector.extract_strided_slice %12 {offsets = [8, 0], sizes = [8, 64], strides = [1, 1]} : vector<16x64xf32> to vector<8x64xf32>
    %104 = vector.extract_strided_slice %19 {offsets = [8, 0], sizes = [8, 64], strides = [1, 1]} : vector<16x64xf32> to vector<8x64xf32>
    %105 = vector.extract_strided_slice %26 {offsets = [8, 0], sizes = [8, 64], strides = [1, 1]} : vector<16x64xf32> to vector<8x64xf32>
    %106 = vector.extract_strided_slice %103 {offsets = [0, 0], sizes = [8, 16], strides = [1, 1]} : vector<8x64xf32> to vector<8x16xf32>
    %107 = vector.extract_strided_slice %104 {offsets = [0, 0], sizes = [8, 16], strides = [1, 1]} : vector<8x64xf32> to vector<8x16xf32>
    %108 = vector.extract_strided_slice %105 {offsets = [0, 0], sizes = [8, 16], strides = [1, 1]} : vector<8x64xf32> to vector<8x16xf32>
    %109 = tpu.transpose %107, [1, 0] : vector<8x16xf32> -> vector<16x8xf32>
    %cst_42 = arith.constant dense<0.000000e+00> : vector<8x8xf32>
    %110 = tpu.matmul %106, %109, %cst_42 {dimension_numbers = #tpu.dot_dimension_numbers<[1], [0], [0], [1], [0, 0, 1, 1], [], []>} : vector<8x16xf32>, vector<16x8xf32>, vector<8x8xf32> -> vector<8x8xf32>
    %cst_43 = arith.constant 2.500000e-01 : f32
    %111 = vector.broadcast %cst_43 : f32 to vector<8x8xf32>
    %112 = arith.mulf %110, %111 : vector<8x8xf32>
    %cst_44 = arith.constant dense<0xFF800000> : vector<8xf32>
    %113 = vector.multi_reduction <maximumf>, %112, %cst_44 [1] : vector<8x8xf32> to vector<8xf32>
    %114 = vector.shape_cast %113 : vector<8xf32> to vector<8x1xf32>
    %115 = vector.broadcast %114 : vector<8x1xf32> to vector<8x8xf32>
    %116 = arith.subf %112, %115 : vector<8x8xf32>
    %117 = math.exp %116 : vector<8x8xf32>
    %cst_45 = arith.constant dense<0.000000e+00> : vector<8xf32>
    %118 = vector.multi_reduction <add>, %117, %cst_45 [1] : vector<8x8xf32> to vector<8xf32>
    %119 = vector.shape_cast %118 : vector<8xf32> to vector<8x1xf32>
    %120 = tpu.reciprocal %119 {approx = true} : vector<8x1xf32> -> vector<8x1xf32>
    %cst_46 = arith.constant dense<0.000000e+00> : vector<8x16xf32>
    %121 = tpu.matmul %117, %108, %cst_46 {dimension_numbers = #tpu.dot_dimension_numbers<[1], [0], [0], [1], [0, 0, 1, 1], [], []>} : vector<8x8xf32>, vector<8x16xf32>, vector<8x16xf32> -> vector<8x16xf32>
    %122 = vector.broadcast %120 : vector<8x1xf32> to vector<8x16xf32>
    %123 = arith.mulf %121, %122 : vector<8x16xf32>
    %124 = vector.extract_strided_slice %103 {offsets = [0, 16], sizes = [8, 16], strides = [1, 1]} : vector<8x64xf32> to vector<8x16xf32>
    %125 = vector.extract_strided_slice %104 {offsets = [0, 16], sizes = [8, 16], strides = [1, 1]} : vector<8x64xf32> to vector<8x16xf32>
    %126 = vector.extract_strided_slice %105 {offsets = [0, 16], sizes = [8, 16], strides = [1, 1]} : vector<8x64xf32> to vector<8x16xf32>
    %127 = tpu.transpose %125, [1, 0] : vector<8x16xf32> -> vector<16x8xf32>
    %cst_47 = arith.constant dense<0.000000e+00> : vector<8x8xf32>
    %128 = tpu.matmul %124, %127, %cst_47 {dimension_numbers = #tpu.dot_dimension_numbers<[1], [0], [0], [1], [0, 0, 1, 1], [], []>} : vector<8x16xf32>, vector<16x8xf32>, vector<8x8xf32> -> vector<8x8xf32>
    %cst_48 = arith.constant 2.500000e-01 : f32
    %129 = vector.broadcast %cst_48 : f32 to vector<8x8xf32>
    %130 = arith.mulf %128, %129 : vector<8x8xf32>
    %cst_49 = arith.constant dense<0xFF800000> : vector<8xf32>
    %131 = vector.multi_reduction <maximumf>, %130, %cst_49 [1] : vector<8x8xf32> to vector<8xf32>
    %132 = vector.shape_cast %131 : vector<8xf32> to vector<8x1xf32>
    %133 = vector.broadcast %132 : vector<8x1xf32> to vector<8x8xf32>
    %134 = arith.subf %130, %133 : vector<8x8xf32>
    %135 = math.exp %134 : vector<8x8xf32>
    %cst_50 = arith.constant dense<0.000000e+00> : vector<8xf32>
    %136 = vector.multi_reduction <add>, %135, %cst_50 [1] : vector<8x8xf32> to vector<8xf32>
    %137 = vector.shape_cast %136 : vector<8xf32> to vector<8x1xf32>
    %138 = tpu.reciprocal %137 {approx = true} : vector<8x1xf32> -> vector<8x1xf32>
    %cst_51 = arith.constant dense<0.000000e+00> : vector<8x16xf32>
    %139 = tpu.matmul %135, %126, %cst_51 {dimension_numbers = #tpu.dot_dimension_numbers<[1], [0], [0], [1], [0, 0, 1, 1], [], []>} : vector<8x8xf32>, vector<8x16xf32>, vector<8x16xf32> -> vector<8x16xf32>
    %140 = vector.broadcast %138 : vector<8x1xf32> to vector<8x16xf32>
    %141 = arith.mulf %139, %140 : vector<8x16xf32>
    %142 = vector.extract_strided_slice %103 {offsets = [0, 32], sizes = [8, 16], strides = [1, 1]} : vector<8x64xf32> to vector<8x16xf32>
    %143 = vector.extract_strided_slice %104 {offsets = [0, 32], sizes = [8, 16], strides = [1, 1]} : vector<8x64xf32> to vector<8x16xf32>
    %144 = vector.extract_strided_slice %105 {offsets = [0, 32], sizes = [8, 16], strides = [1, 1]} : vector<8x64xf32> to vector<8x16xf32>
    %145 = tpu.transpose %143, [1, 0] : vector<8x16xf32> -> vector<16x8xf32>
    %cst_52 = arith.constant dense<0.000000e+00> : vector<8x8xf32>
    %146 = tpu.matmul %142, %145, %cst_52 {dimension_numbers = #tpu.dot_dimension_numbers<[1], [0], [0], [1], [0, 0, 1, 1], [], []>} : vector<8x16xf32>, vector<16x8xf32>, vector<8x8xf32> -> vector<8x8xf32>
    %cst_53 = arith.constant 2.500000e-01 : f32
    %147 = vector.broadcast %cst_53 : f32 to vector<8x8xf32>
    %148 = arith.mulf %146, %147 : vector<8x8xf32>
    %cst_54 = arith.constant dense<0xFF800000> : vector<8xf32>
    %149 = vector.multi_reduction <maximumf>, %148, %cst_54 [1] : vector<8x8xf32> to vector<8xf32>
    %150 = vector.shape_cast %149 : vector<8xf32> to vector<8x1xf32>
    %151 = vector.broadcast %150 : vector<8x1xf32> to vector<8x8xf32>
    %152 = arith.subf %148, %151 : vector<8x8xf32>
    %153 = math.exp %152 : vector<8x8xf32>
    %cst_55 = arith.constant dense<0.000000e+00> : vector<8xf32>
    %154 = vector.multi_reduction <add>, %153, %cst_55 [1] : vector<8x8xf32> to vector<8xf32>
    %155 = vector.shape_cast %154 : vector<8xf32> to vector<8x1xf32>
    %156 = tpu.reciprocal %155 {approx = true} : vector<8x1xf32> -> vector<8x1xf32>
    %cst_56 = arith.constant dense<0.000000e+00> : vector<8x16xf32>
    %157 = tpu.matmul %153, %144, %cst_56 {dimension_numbers = #tpu.dot_dimension_numbers<[1], [0], [0], [1], [0, 0, 1, 1], [], []>} : vector<8x8xf32>, vector<8x16xf32>, vector<8x16xf32> -> vector<8x16xf32>
    %158 = vector.broadcast %156 : vector<8x1xf32> to vector<8x16xf32>
    %159 = arith.mulf %157, %158 : vector<8x16xf32>
    %160 = vector.extract_strided_slice %103 {offsets = [0, 48], sizes = [8, 16], strides = [1, 1]} : vector<8x64xf32> to vector<8x16xf32>
    %161 = vector.extract_strided_slice %104 {offsets = [0, 48], sizes = [8, 16], strides = [1, 1]} : vector<8x64xf32> to vector<8x16xf32>
    %162 = vector.extract_strided_slice %105 {offsets = [0, 48], sizes = [8, 16], strides = [1, 1]} : vector<8x64xf32> to vector<8x16xf32>
    %163 = tpu.transpose %161, [1, 0] : vector<8x16xf32> -> vector<16x8xf32>
    %cst_57 = arith.constant dense<0.000000e+00> : vector<8x8xf32>
    %164 = tpu.matmul %160, %163, %cst_57 {dimension_numbers = #tpu.dot_dimension_numbers<[1], [0], [0], [1], [0, 0, 1, 1], [], []>} : vector<8x16xf32>, vector<16x8xf32>, vector<8x8xf32> -> vector<8x8xf32>
    %cst_58 = arith.constant 2.500000e-01 : f32
    %165 = vector.broadcast %cst_58 : f32 to vector<8x8xf32>
    %166 = arith.mulf %164, %165 : vector<8x8xf32>
    %cst_59 = arith.constant dense<0xFF800000> : vector<8xf32>
    %167 = vector.multi_reduction <maximumf>, %166, %cst_59 [1] : vector<8x8xf32> to vector<8xf32>
    %168 = vector.shape_cast %167 : vector<8xf32> to vector<8x1xf32>
    %169 = vector.broadcast %168 : vector<8x1xf32> to vector<8x8xf32>
    %170 = arith.subf %166, %169 : vector<8x8xf32>
    %171 = math.exp %170 : vector<8x8xf32>
    %cst_60 = arith.constant dense<0.000000e+00> : vector<8xf32>
    %172 = vector.multi_reduction <add>, %171, %cst_60 [1] : vector<8x8xf32> to vector<8xf32>
    %173 = vector.shape_cast %172 : vector<8xf32> to vector<8x1xf32>
    %174 = tpu.reciprocal %173 {approx = true} : vector<8x1xf32> -> vector<8x1xf32>
    %cst_61 = arith.constant dense<0.000000e+00> : vector<8x16xf32>
    %175 = tpu.matmul %171, %162, %cst_61 {dimension_numbers = #tpu.dot_dimension_numbers<[1], [0], [0], [1], [0, 0, 1, 1], [], []>} : vector<8x8xf32>, vector<8x16xf32>, vector<8x16xf32> -> vector<8x16xf32>
    %176 = vector.broadcast %174 : vector<8x1xf32> to vector<8x16xf32>
    %177 = arith.mulf %175, %176 : vector<8x16xf32>
    %178 = tpu.concatenate %123, %141, %159, %177 in 1 : vector<8x16xf32>, vector<8x16xf32>, vector<8x16xf32>, vector<8x16xf32> -> vector<8x64xf32>
    %179 = tpu.concatenate %102, %178 in 0 : vector<8x64xf32>, vector<8x64xf32> -> vector<16x64xf32>
    %c0_62 = arith.constant 0 : index
    %c0_63 = arith.constant 0 : index
    %180 = vector.load %arg10[%c0_62, %c0_63] : memref<64x128xf32, #tpu.memory_space<vmem>>, vector<64x128xf32>
    %cst_64 = arith.constant dense<0.000000e+00> : vector<16x128xf32>
    %181 = tpu.matmul %179, %180, %cst_64 {dimension_numbers = #tpu.dot_dimension_numbers<[1], [0], [0], [1], [0, 0, 1, 1], [], []>} : vector<16x64xf32>, vector<64x128xf32>, vector<16x128xf32> -> vector<16x128xf32>
    %c0_65 = arith.constant 0 : index
    %c0_66 = arith.constant 0 : index
    %182 = vector.load %arg11[%c0_65, %c0_66] : memref<1x128xf32, #tpu.memory_space<vmem>>, vector<1x128xf32>
    %183 = vector.shape_cast %182 : vector<1x128xf32> to vector<128xf32>
    %184 = vector.shape_cast %183 : vector<128xf32> to vector<1x128xf32>
    %185 = vector.broadcast %184 : vector<1x128xf32> to vector<16x128xf32>
    %186 = arith.addf %181, %185 : vector<16x128xf32>
    %187 = vector.shape_cast %186 : vector<16x128xf32> to vector<2x8x128xf32>
    %c0_67 = arith.constant 0 : index
    %c0_68 = arith.constant 0 : index
    %c0_69 = arith.constant 0 : index
    %188 = vector.load %arg12[%c0_67, %c0_68, %c0_69] : memref<2x8x128xf32, #tpu.memory_space<vmem>>, vector<2x8x128xf32>
    tpu.vector_store %arg12[%c0_67, %c0_68, %c0_69], %187 {strides = array<i32>} : memref<2x8x128xf32, #tpu.memory_space<vmem>>, vector<2x8x128xf32>,
    return
  }
  func.func @transform_0(%arg0: i32) -> (i32, i32, i32) {
    %c0_i32 = arith.constant 0 : i32
    %c0_i32_0 = arith.constant 0 : i32
    %c0_i32_1 = arith.constant 0 : i32
    return %arg0, %c0_i32, %c0_i32_0 : i32, i32, i32
  }
  func.func @transform_1(%arg0: i32) -> (i32, i32, i32) {
    %c0_i32 = arith.constant 0 : i32
    %c0_i32_0 = arith.constant 0 : i32
    %c0_i32_1 = arith.constant 0 : i32
    return %arg0, %c0_i32, %c0_i32_0 : i32, i32, i32
  }
  func.func @transform_2(%arg0: i32) -> (i32, i32, i32) {
    %c0_i32 = arith.constant 0 : i32
    %c0_i32_0 = arith.constant 0 : i32
    %c0_i32_1 = arith.constant 0 : i32
    return %arg0, %c0_i32, %c0_i32_0 : i32, i32, i32
  }
  func.func @transform_3(%arg0: i32) -> (i32, i32) {
    %c0_i32 = arith.constant 0 : i32
    %c0_i32_0 = arith.constant 0 : i32
    %c0_i32_1 = arith.constant 0 : i32
    return %c0_i32, %c0_i32_0 : i32, i32
  }
  func.func @transform_4(%arg0: i32) -> (i32, i32) {
    %c0_i32 = arith.constant 0 : i32
    %c0_i32_0 = arith.constant 0 : i32
    %c0_i32_1 = arith.constant 0 : i32
    return %c0_i32, %c0_i32_0 : i32, i32
  }
  func.func @transform_5(%arg0: i32) -> (i32, i32) {
    %c0_i32 = arith.constant 0 : i32
    %c0_i32_0 = arith.constant 0 : i32
    %c0_i32_1 = arith.constant 0 : i32
    return %c0_i32, %c0_i32_0 : i32, i32
  }
  func.func @transform_6(%arg0: i32) -> (i32, i32) {
    %c0_i32 = arith.constant 0 : i32
    %c0_i32_0 = arith.constant 0 : i32
    %c0_i32_1 = arith.constant 0 : i32
    return %c0_i32, %c0_i32_0 : i32, i32
  }
  func.func @transform_7(%arg0: i32) -> (i32, i32) {
    %c0_i32 = arith.constant 0 : i32
    %c0_i32_0 = arith.constant 0 : i32
    %c0_i32_1 = arith.constant 0 : i32
    return %c0_i32, %c0_i32_0 : i32, i32
  }
  func.func @transform_8(%arg0: i32) -> (i32, i32) {
    %c0_i32 = arith.constant 0 : i32
    %c0_i32_0 = arith.constant 0 : i32
    %c0_i32_1 = arith.constant 0 : i32
    return %c0_i32, %c0_i32_0 : i32, i32
  }
  func.func @transform_9(%arg0: i32) -> (i32, i32) {
    %c0_i32 = arith.constant 0 : i32
    %c0_i32_0 = arith.constant 0 : i32
    %c0_i32_1 = arith.constant 0 : i32
    return %c0_i32, %c0_i32_0 : i32, i32
  }
  func.func @transform_10(%arg0: i32) -> (i32, i32) {
    %c0_i32 = arith.constant 0 : i32
    %c0_i32_0 = arith.constant 0 : i32
    %c0_i32_1 = arith.constant 0 : i32
    return %c0_i32, %c0_i32_0 : i32, i32
  }
  func.func @transform_11(%arg0: i32) -> (i32, i32, i32) {
    %c0_i32 = arith.constant 0 : i32
    %c0_i32_0 = arith.constant 0 : i32
    %c0_i32_1 = arith.constant 0 : i32
    return %arg0, %c0_i32, %c0_i32_0 : i32, i32, i32
  }
}

</mosaic_0001>

<llo_original>
// kernel: tpu_custom_call.1
$region0: #{tpu_custom_call.1}
  #allocation0 [shape = 'u32[]', space=smem, size = 0x4, offset = 0x4, fixed_abs, tag = 'smem constant byte address 0x4 - core index']
  #allocation1 [shape = 'u32[144,128]{1,0:T(1,128)}', space=vmem, size = 0x12000, scoped, tag = 'internal scratch']
  %s0 = inlined_call_operand.hbm [shape: f32[2,8,32], index: 0, kind: input, shape index: {}]
  %s1 = inlined_call_operand.hbm [shape: f32[2,8,32], index: 1, kind: input, shape index: {}]
  %s2 = inlined_call_operand.hbm [shape: f32[2,8,32], index: 2, kind: input, shape index: {}]
  %s3 = inlined_call_operand.hbm [shape: f32[32,64], index: 3, kind: input, shape index: {}]
  %s4 = inlined_call_operand.vmem [shape: f32[1,64], index: 4, kind: input, shape index: {}]
  %s5 = inlined_call_operand.hbm [shape: f32[32,64], index: 5, kind: input, shape index: {}]
  %s6 = inlined_call_operand.vmem [shape: f32[1,64], index: 6, kind: input, shape index: {}]
  %s7 = inlined_call_operand.hbm [shape: f32[32,64], index: 7, kind: input, shape index: {}]
  %s8 = inlined_call_operand.vmem [shape: f32[1,64], index: 8, kind: input, shape index: {}]
  %s9 = inlined_call_operand.hbm [shape: f32[64,128], index: 9, kind: input, shape index: {}]
  %s10 = inlined_call_operand.vmem [shape: f32[1,128], index: 10, kind: input, shape index: {}]
  %s11 = inlined_call_operand.hbm [shape: f32[2,8,128], index: 11, kind: output, shape index: {}]
  %s12 = sld [smem:[#allocation0]]
  $region82: #{tpu_custom_call.1} parent=0
    _
  %s14 = ssub.s32 1, %s12
  %s15 = scalar_select 0, %s14, %s12
  $region1: #{tpu_custom_call.1} parent=0
    #allocation2 [shape = 'u8[8192]{0}', space=vmem, size = 0x2000, scoped, tag = 'input window, operand 0, single buffered']
    #allocation3 [shape = 's32[1]{0}', space=sflag, size = 0x4, scoped, tag = 'scoped memory for tpu_custom_call.1']
    #allocation4 [shape = 's32[1]{0}', space=sflag, size = 0x4, scoped, tag = 'scoped memory for tpu_custom_call.1']
    #allocation5 [shape = 'u8[8192]{0}', space=vmem, size = 0x2000, scoped, tag = 'input window, operand 1, single buffered']
    #allocation6 [shape = 's32[1]{0}', space=sflag, size = 0x4, scoped, tag = 'scoped memory for tpu_custom_call.1']
    #allocation7 [shape = 'u8[8192]{0}', space=vmem, size = 0x2000, scoped, tag = 'input window, operand 2, single buffered']
    #allocation8 [shape = 'u8[16384]{0}', space=vmem, size = 0x4000, scoped, tag = 'input window, operand 3, single buffered']
    #allocation9 [shape = 's32[1]{0}', space=sflag, size = 0x4, scoped, tag = 'scoped memory for tpu_custom_call.1']
    #allocation10 [shape = 'u8[16384]{0}', space=vmem, size = 0x4000, scoped, tag = 'input window, operand 5, single buffered']
    #allocation11 [shape = 'u8[16384]{0}', space=vmem, size = 0x4000, scoped, tag = 'input window, operand 7, single buffered']
    #allocation12 [shape = 's32[1]{0}', space=sflag, size = 0x4, scoped, tag = 'scoped memory for tpu_custom_call.1']
    #allocation13 [shape = 'u8[32768]{0}', space=vmem, size = 0x8000, scoped, tag = 'input window, operand 9, single buffered']
    #allocation14 [shape = 'u8[8192]{0}', space=vmem, size = 0x2000, scoped, tag = 'output window, operand 0, single buffered']
    %16 = vsyncpa [#allocation3], 0
    %17 = vsyncpa [#allocation6], 0
    %18 = vsyncpa [#allocation9], 0
    %19 = vsyncpa [#allocation12], 0
    %20 = vsyncpa [#allocation4], 0
    // Predicated region
    $region2: #{tpu_custom_call.1} parent=1 // pred_check
      _
    $region3: #{tpu_custom_call.1} parent=1 // pred_check_branch
      %22 = sbr.rel (0) target = $region5
    $region4: #{tpu_custom_call.1} parent=1 // pred_region
      %s24 = ssub.s32 256, 256
      %25 = vsyncadd [#allocation3], %s24
      %s26 = sshll.u32 [#allocation2], 4
      %s27 = int_to_ptr.vmem [resolvable:$true] %s26
      %32 = dma.hbm_to_vmem [thread:$0]  %s0, 256, %s27, [#allocation3], 128, 128, 8
    $region5: #{tpu_custom_call.1} parent=1 // pred_fallthru
      _
    // Predicated region
    $region6: #{tpu_custom_call.1} parent=1 // pred_check
      _
    $region7: #{tpu_custom_call.1} parent=1 // pred_check_branch
      %34 = sbr.rel (0) target = $region9
    $region8: #{tpu_custom_call.1} parent=1 // pred_region
      %s36 = ssub.s32 256, 256
      %37 = vsyncadd [#allocation6], %s36
      %s38 = sshll.u32 [#allocation5], 4
      %s39 = int_to_ptr.vmem [resolvable:$true] %s38
      %44 = dma.hbm_to_vmem [thread:$0]  %s1, 256, %s39, [#allocation6], 128, 128, 8
    $region9: #{tpu_custom_call.1} parent=1 // pred_fallthru
      _
    // Predicated region
    $region10: #{tpu_custom_call.1} parent=1 // pred_check
      _
    $region11: #{tpu_custom_call.1} parent=1 // pred_check_branch
      %46 = sbr.rel (0) target = $region13
    $region12: #{tpu_custom_call.1} parent=1 // pred_region
      %s48 = ssub.s32 256, 256
      %49 = vsyncadd [#allocation6], %s48
      %s50 = sshll.u32 [#allocation7], 4
      %s51 = int_to_ptr.vmem [resolvable:$true] %s50
      %56 = dma.hbm_to_vmem [thread:$0]  %s2, 256, %s51, [#allocation6], 128, 128, 8
    $region13: #{tpu_custom_call.1} parent=1 // pred_fallthru
      _
    // Predicated region
    $region14: #{tpu_custom_call.1} parent=1 // pred_check
      _
    $region15: #{tpu_custom_call.1} parent=1 // pred_check_branch
      %58 = sbr.rel (0) target = $region17
    $region16: #{tpu_custom_call.1} parent=1 // pred_region
      %s60 = ssub.s32 512, 512
      %61 = vsyncadd [#allocation9], %s60
      %s62 = sshll.u32 [#allocation8], 4
      %s63 = int_to_ptr.vmem [resolvable:$true] %s62
      %68 = dma.hbm_to_vmem [thread:$0]  %s3, 512, %s63, [#allocation9], 128, 128, 8
    $region17: #{tpu_custom_call.1} parent=1 // pred_fallthru
      _
    // Predicated region
    $region18: #{tpu_custom_call.1} parent=1 // pred_check
      _
    $region19: #{tpu_custom_call.1} parent=1 // pred_check_branch
      %70 = sbr.rel (0) target = $region21
    $region20: #{tpu_custom_call.1} parent=1 // pred_region
      _
    $region21: #{tpu_custom_call.1} parent=1 // pred_fallthru
      _
    // Predicated region
    $region22: #{tpu_custom_call.1} parent=1 // pred_check
      _
    $region23: #{tpu_custom_call.1} parent=1 // pred_check_branch
      %72 = sbr.rel (0) target = $region25
    $region24: #{tpu_custom_call.1} parent=1 // pred_region
      %s74 = ssub.s32 512, 512
      %75 = vsyncadd [#allocation9], %s74
      %s76 = sshll.u32 [#allocation10], 4
      %s77 = int_to_ptr.vmem [resolvable:$true] %s76
      %82 = dma.hbm_to_vmem [thread:$0]  %s5, 512, %s77, [#allocation9], 128, 128, 8
    $region25: #{tpu_custom_call.1} parent=1 // pred_fallthru
      _
    // Predicated region
    $region26: #{tpu_custom_call.1} parent=1 // pred_check
      _
    $region27: #{tpu_custom_call.1} parent=1 // pred_check_branch
      %84 = sbr.rel (0) target = $region29
    $region28: #{tpu_custom_call.1} parent=1 // pred_region
      _
    $region29: #{tpu_custom_call.1} parent=1 // pred_fallthru
      _
    // Predicated region
    $region30: #{tpu_custom_call.1} parent=1 // pred_check
      _
    $region31: #{tpu_custom_call.1} parent=1 // pred_check_branch
      %86 = sbr.rel (0) target = $region33
    $region32: #{tpu_custom_call.1} parent=1 // pred_region
      %s88 = ssub.s32 512, 512
      %89 = vsyncadd [#allocation12], %s88
      %s90 = sshll.u32 [#allocation11], 4
      %s91 = int_to_ptr.vmem [resolvable:$true] %s90
      %96 = dma.hbm_to_vmem [thread:$0]  %s7, 512, %s91, [#allocation12], 128, 128, 8
    $region33: #{tpu_custom_call.1} parent=1 // pred_fallthru
      _
    // Predicated region
    $region34: #{tpu_custom_call.1} parent=1 // pred_check
      _
    $region35: #{tpu_custom_call.1} parent=1 // pred_check_branch
      %98 = sbr.rel (0) target = $region37
    $region36: #{tpu_custom_call.1} parent=1 // pred_region
      _
    $region37: #{tpu_custom_call.1} parent=1 // pred_fallthru
      _
    // Predicated region
    $region38: #{tpu_custom_call.1} parent=1 // pred_check
      _
    $region39: #{tpu_custom_call.1} parent=1 // pred_check_branch
      %100 = sbr.rel (0) target = $region41
    $region40: #{tpu_custom_call.1} parent=1 // pred_region
      %s102 = ssub.s32 1024, 1024
      %103 = vsyncadd [#allocation12], %s102
      %s104 = sshll.u32 [#allocation13], 4
      %s105 = int_to_ptr.vmem [resolvable:$true] %s104
      %110 = dma.hbm_to_vmem [thread:$0]  %s9, 1024, %s105, [#allocation12], 128, 128, 8
    $region41: #{tpu_custom_call.1} parent=1 // pred_fallthru
      _
    // Predicated region
    $region42: #{tpu_custom_call.1} parent=1 // pred_check
      _
    $region43: #{tpu_custom_call.1} parent=1 // pred_check_branch
      %112 = sbr.rel (0) target = $region45
    $region44: #{tpu_custom_call.1} parent=1 // pred_region
      _
    $region45: #{tpu_custom_call.1} parent=1 // pred_fallthru
      _
    // Predicated region
    $region46: #{tpu_custom_call.1} parent=1 // pred_check
      _
    $region47: #{tpu_custom_call.1} parent=1 // pred_check_branch
      %114 = sbr.rel (0) target = $region49
    $region48: #{tpu_custom_call.1} parent=1 // pred_region
      %115 = dma.done [#allocation3], 256
    $region49: #{tpu_custom_call.1} parent=1 // pred_fallthru
      _
    // Predicated region
    $region50: #{tpu_custom_call.1} parent=1 // pred_check
      _
    $region51: #{tpu_custom_call.1} parent=1 // pred_check_branch
      %117 = sbr.rel (0) target = $region53
    $region52: #{tpu_custom_call.1} parent=1 // pred_region
      %118 = dma.done [#allocation6], 256
    $region53: #{tpu_custom_call.1} parent=1 // pred_fallthru
      _
    // Predicated region
    $region54: #{tpu_custom_call.1} parent=1 // pred_check
      _
    $region55: #{tpu_custom_call.1} parent=1 // pred_check_branch
      %120 = sbr.rel (0) target = $region57
    $region56: #{tpu_custom_call.1} parent=1 // pred_region
      %121 = dma.done [#allocation6], 256
    $region57: #{tpu_custom_call.1} parent=1 // pred_fallthru
      _
    // Predicated region
    $region58: #{tpu_custom_call.1} parent=1 // pred_check
      _
    $region59: #{tpu_custom_call.1} parent=1 // pred_check_branch
      %123 = sbr.rel (0) target = $region61
    $region60: #{tpu_custom_call.1} parent=1 // pred_region
      %124 = dma.done [#allocation9], 512
    $region61: #{tpu_custom_call.1} parent=1 // pred_fallthru
      _
    // Predicated region
    $region62: #{tpu_custom_call.1} parent=1 // pred_check
      _
    $region63: #{tpu_custom_call.1} parent=1 // pred_check_branch
      %126 = sbr.rel (0) target = $region65
    $region64: #{tpu_custom_call.1} parent=1 // pred_region
      %127 = dma.done [#allocation9], 512
    $region65: #{tpu_custom_call.1} parent=1 // pred_fallthru
      _
    // Predicated region
    $region66: #{tpu_custom_call.1} parent=1 // pred_check
      _
    $region67: #{tpu_custom_call.1} parent=1 // pred_check_branch
      %129 = sbr.rel (0) target = $region69
    $region68: #{tpu_custom_call.1} parent=1 // pred_region
      %130 = dma.done [#allocation12], 512
    $region69: #{tpu_custom_call.1} parent=1 // pred_fallthru
      _
    // Predicated region
    $region70: #{tpu_custom_call.1} parent=1 // pred_check
      _
    $region71: #{tpu_custom_call.1} parent=1 // pred_check_branch
      %132 = sbr.rel (0) target = $region73
    $region72: #{tpu_custom_call.1} parent=1 // pred_region
      %133 = dma.done [#allocation12], 1024
    $region73: #{tpu_custom_call.1} parent=1 // pred_fallthru
      _
    %v134 = vld [vmem:[#allocation2] sm:$0xff]
    %v135 = vld [vmem:[#allocation2 + $0x8] sm:$0xff]
    %v136 = vld [vmem:[#allocation5] sm:$0xff]
    %v137 = vld [vmem:[#allocation5 + $0x8] sm:$0xff]
    %v138 = vld [vmem:[#allocation7] sm:$0xff]
    %v139 = vld [vmem:[#allocation7 + $0x8] sm:$0xff]
    %v140 = vld [vmem:[#allocation8] sm:$0xff]
    %v141 = vld [vmem:[#allocation8 + $0x8] sm:$0xff]
    %v142 = vld [vmem:[#allocation8 + $0x10] sm:$0xff]
    %v143 = vld [vmem:[#allocation8 + $0x18] sm:$0xff]
    %v144 = vld [vmem:[%s4] sm:$0x1]
    %v146 = vlaneseq
    %v147 = vshrl.u32 %v146, 7
    %v148 = vsub.s32 0, %v147
    %v149 = vrot.slane %v144, %v148
    %vm151 = vcmask 261120
    %v153 = vsel %vm151, %v134, 0
    %v156 = vsel %vm151, %v135, 0
    %158 = vmatprep.subr.mxu0 0.0
    %159 = vmatpush1.msra.mxu0 0.0
    %160 = vmatprep.subr.mxu0 0.0
    %161 = vmatpush1.msra.mxu0 0.0
    %162 = vmatprep.subr.mxu0 0.0
    %163 = vmatpush1.msra.mxu0 0.0
    %164 = vmatprep.subr.mxu0 0.0
    %165 = vmatpush1.msra.mxu0 0.0
    %166 = vmatprep.subr.mxu0 0.0
    %167 = vmatpush1.msra.mxu0 0.0
    %168 = vmatprep.subr.mxu0 0.0
    %169 = vmatpush1.msra.mxu0 0.0
    %170 = vmatprep.subr.mxu0 0.0
    %171 = vmatpush1.msra.mxu0 0.0
    %172 = vmatprep.subr.mxu0 0.0
    %173 = vmatpush1.msra.mxu0 0.0
    %174 = vmatprep.subr.mxu0 0.0
    %175 = vmatpush1.msra.mxu0 0.0
    %176 = vmatprep.subr.mxu0 0.0
    %177 = vmatpush1.msra.mxu0 0.0
    %178 = vmatprep.subr.mxu0 0.0
    %179 = vmatpush1.msra.mxu0 0.0
    %180 = vmatprep.subr.mxu0 0.0
    %181 = vmatpush1.msra.mxu0 0.0
    %182 = vmatprep.subr.mxu0 0.0
    %183 = vmatpush1.msra.mxu0 %v143
    %184 = vmatprep.subr.mxu0 0.0
    %185 = vmatpush1.msra.mxu0 %v142
    %186 = vmatprep.subr.mxu0 0.0
    %187 = vmatpush1.msra.mxu0 %v141
    %188 = vmatprep.subr.mxu0 0.0
    %189 = vmatpush1.msra.mxu0 %v140
    %190 = vmatprep.subr.mxu0 0.0
    %191 = vmatpush2.msra.mxu0 0.0
    %192 = vmatprep.subr.mxu0 0.0
    %193 = vmatpush2.msra.mxu0 0.0
    %194 = vmatprep.subr.mxu0 0.0
    %195 = vmatpush2.msra.mxu0 0.0
    %196 = vmatprep.subr.mxu0 0.0
    %197 = vmatpush2.msra.mxu0 0.0
    %198 = vmatprep.subr.mxu0 0.0
    %199 = vmatpush2.msra.mxu0 0.0
    %200 = vmatprep.subr.mxu0 0.0
    %201 = vmatpush2.msra.mxu0 0.0
    %202 = vmatprep.subr.mxu0 0.0
    %203 = vmatpush2.msra.mxu0 0.0
    %204 = vmatprep.subr.mxu0 0.0
    %205 = vmatpush2.msra.mxu0 0.0
    %206 = vmatprep.subr.mxu0 0.0
    %207 = vmatpush2.msra.mxu0 0.0
    %208 = vmatprep.subr.mxu0 0.0
    %209 = vmatpush2.msra.mxu0 0.0
    %210 = vmatprep.subr.mxu0 0.0
    %211 = vmatpush2.msra.mxu0 0.0
    %212 = vmatprep.subr.mxu0 0.0
    %213 = vmatpush2.msra.mxu0 0.0
    %214 = vmatprep.subr.mxu0 0.0
    %215 = vmatpush2.msra.mxu0 0.0
    %216 = vmatprep.subr.mxu0 0.0
    %217 = vmatpush2.msra.mxu0 0.0
    %218 = vmatprep.subr.mxu0 0.0
    %219 = vmatpush2.msra.mxu0 0.0
    %220 = vmatprep.subr.mxu0 0.0
    %221 = vmatpush2.msra.mxu0 0.0
    %222 = vmatprep.mubr.f32.mxu0 0.0
    %223 = vmatmul.mubr.f32.gmra.mxu0 %v153
    %v224 = vpop.f32.mrf.mxu0
    %v225 = vadd.f32 %v149, %v224
    %v226 = vpop.f32.mrf.mxu0
    %227 = vmatprep.mubr.f32.mxu0 0.0
    %228 = vmatmul.mubr.f32.gmra.mxu0 %v156
    %v229 = vpop.f32.mrf.mxu0
    %v230 = vadd.f32 %v149, %v229
    %v231 = vpop.f32.mrf.mxu0
    %232 = vdwg.mxu0
    %v233 = vld [vmem:[#allocation10] sm:$0xff]
    %v234 = vld [vmem:[#allocation10 + $0x8] sm:$0xff]
    %v235 = vld [vmem:[#allocation10 + $0x10] sm:$0xff]
    %v236 = vld [vmem:[#allocation10 + $0x18] sm:$0xff]
    %v237 = vld [vmem:[%s6] sm:$0x1]
    %v239 = vlaneseq
    %v240 = vshrl.u32 %v239, 7
    %v241 = vsub.s32 0, %v240
    %v242 = vrot.slane %v237, %v241
    %v245 = vsel %vm151, %v136, 0
    %v248 = vsel %vm151, %v137, 0
    %250 = vmatprep.subr.mxu0 0.0
    %251 = vmatpush1.msra.mxu0 0.0
    %252 = vmatprep.subr.mxu0 0.0
    %253 = vmatpush1.msra.mxu0 0.0
    %254 = vmatprep.subr.mxu0 0.0
    %255 = vmatpush1.msra.mxu0 0.0
    %256 = vmatprep.subr.mxu0 0.0
    %257 = vmatpush1.msra.mxu0 0.0
    %258 = vmatprep.subr.mxu0 0.0
    %259 = vmatpush1.msra.mxu0 0.0
    %260 = vmatprep.subr.mxu0 0.0
    %261 = vmatpush1.msra.mxu0 0.0
    %262 = vmatprep.subr.mxu0 0.0
    %263 = vmatpush1.msra.mxu0 0.0
    %264 = vmatprep.subr.mxu0 0.0
    %265 = vmatpush1.msra.mxu0 0.0
    %266 = vmatprep.subr.mxu0 0.0
    %267 = vmatpush1.msra.mxu0 0.0
    %268 = vmatprep.subr.mxu0 0.0
    %269 = vmatpush1.msra.mxu0 0.0
    %270 = vmatprep.subr.mxu0 0.0
    %271 = vmatpush1.msra.mxu0 0.0
    %272 = vmatprep.subr.mxu0 0.0
    %273 = vmatpush1.msra.mxu0 0.0
    %274 = vmatprep.subr.mxu0 0.0
    %275 = vmatpush1.msra.mxu0 %v236
    %276 = vmatprep.subr.mxu0 0.0
    %277 = vmatpush1.msra.mxu0 %v235
    %278 = vmatprep.subr.mxu0 0.0
    %279 = vmatpush1.msra.mxu0 %v234
    %280 = vmatprep.subr.mxu0 0.0
    %281 = vmatpush1.msra.mxu0 %v233
    %282 = vmatprep.subr.mxu0 0.0
    %283 = vmatpush2.msra.mxu0 0.0
    %284 = vmatprep.subr.mxu0 0.0
    %285 = vmatpush2.msra.mxu0 0.0
    %286 = vmatprep.subr.mxu0 0.0
    %287 = vmatpush2.msra.mxu0 0.0
    %288 = vmatprep.subr.mxu0 0.0
    %289 = vmatpush2.msra.mxu0 0.0
    %290 = vmatprep.subr.mxu0 0.0
    %291 = vmatpush2.msra.mxu0 0.0
    %292 = vmatprep.subr.mxu0 0.0
    %293 = vmatpush2.msra.mxu0 0.0
    %294 = vmatprep.subr.mxu0 0.0
    %295 = vmatpush2.msra.mxu0 0.0
    %296 = vmatprep.subr.mxu0 0.0
    %297 = vmatpush2.msra.mxu0 0.0
    %298 = vmatprep.subr.mxu0 0.0
    %299 = vmatpush2.msra.mxu0 0.0
    %300 = vmatprep.subr.mxu0 0.0
    %301 = vmatpush2.msra.mxu0 0.0
    %302 = vmatprep.subr.mxu0 0.0
    %303 = vmatpush2.msra.mxu0 0.0
    %304 = vmatprep.subr.mxu0 0.0
    %305 = vmatpush2.msra.mxu0 0.0
    %306 = vmatprep.subr.mxu0 0.0
    %307 = vmatpush2.msra.mxu0 0.0
    %308 = vmatprep.subr.mxu0 0.0
    %309 = vmatpush2.msra.mxu0 0.0
    %310 = vmatprep.subr.mxu0 0.0
    %311 = vmatpush2.msra.mxu0 0.0
    %312 = vmatprep.subr.mxu0 0.0
    %313 = vmatpush2.msra.mxu0 0.0
    %314 = vmatprep.mubr.f32.mxu0 0.0
    %315 = vmatmul.mubr.f32.gmra.mxu0 %v245
    %v316 = vpop.f32.mrf.mxu0
    %v317 = vadd.f32 %v242, %v316
    %v318 = vpop.f32.mrf.mxu0
    %319 = vmatprep.mubr.f32.mxu0 0.0
    %320 = vmatmul.mubr.f32.gmra.mxu0 %v248
    %v321 = vpop.f32.mrf.mxu0
    %v322 = vadd.f32 %v242, %v321
    %v323 = vpop.f32.mrf.mxu0
    %324 = vdwg.mxu0
    %v325 = vld [vmem:[#allocation11] sm:$0xff]
    %v326 = vld [vmem:[#allocation11 + $0x8] sm:$0xff]
    %v327 = vld [vmem:[#allocation11 + $0x10] sm:$0xff]
    %v328 = vld [vmem:[#allocation11 + $0x18] sm:$0xff]
    %v329 = vld [vmem:[%s8] sm:$0x1]
    %v331 = vlaneseq
    %v332 = vshrl.u32 %v331, 7
    %v333 = vsub.s32 0, %v332
    %v334 = vrot.slane %v329, %v333
    %v337 = vsel %vm151, %v138, 0
    %v340 = vsel %vm151, %v139, 0
    %342 = vmatprep.subr.mxu0 0.0
    %343 = vmatpush1.msra.mxu0 0.0
    %344 = vmatprep.subr.mxu0 0.0
    %345 = vmatpush1.msra.mxu0 0.0
    %346 = vmatprep.subr.mxu0 0.0
    %347 = vmatpush1.msra.mxu0 0.0
    %348 = vmatprep.subr.mxu0 0.0
    %349 = vmatpush1.msra.mxu0 0.0
    %350 = vmatprep.subr.mxu0 0.0
    %351 = vmatpush1.msra.mxu0 0.0
    %352 = vmatprep.subr.mxu0 0.0
    %353 = vmatpush1.msra.mxu0 0.0
    %354 = vmatprep.subr.mxu0 0.0
    %355 = vmatpush1.msra.mxu0 0.0
    %356 = vmatprep.subr.mxu0 0.0
    %357 = vmatpush1.msra.mxu0 0.0
    %358 = vmatprep.subr.mxu0 0.0
    %359 = vmatpush1.msra.mxu0 0.0
    %360 = vmatprep.subr.mxu0 0.0
    %361 = vmatpush1.msra.mxu0 0.0
    %362 = vmatprep.subr.mxu0 0.0
    %363 = vmatpush1.msra.mxu0 0.0
    %364 = vmatprep.subr.mxu0 0.0
    %365 = vmatpush1.msra.mxu0 0.0
    %366 = vmatprep.subr.mxu0 0.0
    %367 = vmatpush1.msra.mxu0 %v328
    %368 = vmatprep.subr.mxu0 0.0
    %369 = vmatpush1.msra.mxu0 %v327
    %370 = vmatprep.subr.mxu0 0.0
    %371 = vmatpush1.msra.mxu0 %v326
    %372 = vmatprep.subr.mxu0 0.0
    %373 = vmatpush1.msra.mxu0 %v325
    %374 = vmatprep.subr.mxu0 0.0
    %375 = vmatpush2.msra.mxu0 0.0
    %376 = vmatprep.subr.mxu0 0.0
    %377 = vmatpush2.msra.mxu0 0.0
    %378 = vmatprep.subr.mxu0 0.0
    %379 = vmatpush2.msra.mxu0 0.0
    %380 = vmatprep.subr.mxu0 0.0
    %381 = vmatpush2.msra.mxu0 0.0
    %382 = vmatprep.subr.mxu0 0.0
    %383 = vmatpush2.msra.mxu0 0.0
    %384 = vmatprep.subr.mxu0 0.0
    %385 = vmatpush2.msra.mxu0 0.0
    %386 = vmatprep.subr.mxu0 0.0
    %387 = vmatpush2.msra.mxu0 0.0
    %388 = vmatprep.subr.mxu0 0.0
    %389 = vmatpush2.msra.mxu0 0.0
    %390 = vmatprep.subr.mxu0 0.0
    %391 = vmatpush2.msra.mxu0 0.0
    %392 = vmatprep.subr.mxu0 0.0
    %393 = vmatpush2.msra.mxu0 0.0
    %394 = vmatprep.subr.mxu0 0.0
    %395 = vmatpush2.msra.mxu0 0.0
    %396 = vmatprep.subr.mxu0 0.0
    %397 = vmatpush2.msra.mxu0 0.0
    %398 = vmatprep.subr.mxu0 0.0
    %399 = vmatpush2.msra.mxu0 0.0
    %400 = vmatprep.subr.mxu0 0.0
    %401 = vmatpush2.msra.mxu0 0.0
    %402 = vmatprep.subr.mxu0 0.0
    %403 = vmatpush2.msra.mxu0 0.0
    %404 = vmatprep.subr.mxu0 0.0
    %405 = vmatpush2.msra.mxu0 0.0
    %406 = vmatprep.mubr.f32.mxu0 0.0
    %407 = vmatmul.mubr.f32.gmra.mxu0 %v337
    %v408 = vpop.f32.mrf.mxu0
    %v409 = vadd.f32 %v334, %v408
    %v410 = vpop.f32.mrf.mxu0
    %411 = vmatprep.mubr.f32.mxu0 0.0
    %412 = vmatmul.mubr.f32.gmra.mxu0 %v340
    %v413 = vpop.f32.mrf.mxu0
    %v414 = vadd.f32 %v334, %v413
    %v415 = vpop.f32.mrf.mxu0
    %416 = vdwg.mxu0
    %vm417 = vcmask 130048
    %v419 = vsel %vm417, %v225, 0
    %v422 = vsel %vm417, %v317, 0
    %424 = vmatprep.subr.mxu0 0.0
    %425 = vmatpush1.xpose.msra.mxu0 0.0
    %426 = vmatprep.subr.mxu0 0.0
    %427 = vmatpush1.xpose.msra.mxu0 0.0
    %428 = vmatprep.subr.mxu0 0.0
    %429 = vmatpush1.xpose.msra.mxu0 0.0
    %430 = vmatprep.subr.mxu0 0.0
    %431 = vmatpush1.xpose.msra.mxu0 0.0
    %432 = vmatprep.subr.mxu0 0.0
    %433 = vmatpush1.xpose.msra.mxu0 0.0
    %434 = vmatprep.subr.mxu0 0.0
    %435 = vmatpush1.xpose.msra.mxu0 0.0
    %436 = vmatprep.subr.mxu0 0.0
    %437 = vmatpush1.xpose.msra.mxu0 0.0
    %438 = vmatprep.subr.mxu0 0.0
    %439 = vmatpush1.xpose.msra.mxu0 0.0
    %440 = vmatprep.subr.mxu0 0.0
    %441 = vmatpush1.xpose.msra.mxu0 0.0
    %442 = vmatprep.subr.mxu0 0.0
    %443 = vmatpush1.xpose.msra.mxu0 0.0
    %444 = vmatprep.subr.mxu0 0.0
    %445 = vmatpush1.xpose.msra.mxu0 0.0
    %446 = vmatprep.subr.mxu0 0.0
    %447 = vmatpush1.xpose.msra.mxu0 0.0
    %448 = vmatprep.subr.mxu0 0.0
    %449 = vmatpush1.xpose.msra.mxu0 0.0
    %450 = vmatprep.subr.mxu0 0.0
    %451 = vmatpush1.xpose.msra.mxu0 0.0
    %452 = vmatprep.subr.mxu0 0.0
    %453 = vmatpush1.xpose.msra.mxu0 0.0
    %454 = vmatprep.subr.mxu0 0.0
    %455 = vmatpush1.xpose.msra.mxu0 %v422
    %456 = vmatprep.subr.mxu0 0.0
    %457 = vmatpush2.xpose.msra.mxu0 0.0
    %458 = vmatprep.subr.mxu0 0.0
    %459 = vmatpush2.xpose.msra.mxu0 0.0
    %460 = vmatprep.subr.mxu0 0.0
    %461 = vmatpush2.xpose.msra.mxu0 0.0
    %462 = vmatprep.subr.mxu0 0.0
    %463 = vmatpush2.xpose.msra.mxu0 0.0
    %464 = vmatprep.subr.mxu0 0.0
    %465 = vmatpush2.xpose.msra.mxu0 0.0
    %466 = vmatprep.subr.mxu0 0.0
    %467 = vmatpush2.xpose.msra.mxu0 0.0
    %468 = vmatprep.subr.mxu0 0.0
    %469 = vmatpush2.xpose.msra.mxu0 0.0
    %470 = vmatprep.subr.mxu0 0.0
    %471 = vmatpush2.xpose.msra.mxu0 0.0
    %472 = vmatprep.subr.mxu0 0.0
    %473 = vmatpush2.xpose.msra.mxu0 0.0
    %474 = vmatprep.subr.mxu0 0.0
    %475 = vmatpush2.xpose.msra.mxu0 0.0
    %476 = vmatprep.subr.mxu0 0.0
    %477 = vmatpush2.xpose.msra.mxu0 0.0
    %478 = vmatprep.subr.mxu0 0.0
    %479 = vmatpush2.xpose.msra.mxu0 0.0
    %480 = vmatprep.subr.mxu0 0.0
    %481 = vmatpush2.xpose.msra.mxu0 0.0
    %482 = vmatprep.subr.mxu0 0.0
    %483 = vmatpush2.xpose.msra.mxu0 0.0
    %484 = vmatprep.subr.mxu0 0.0
    %485 = vmatpush2.xpose.msra.mxu0 0.0
    %486 = vmatprep.subr.mxu0 0.0
    %487 = vmatpush2.xpose.msra.mxu0 0.0
    %488 = vmatprep.mubr.f32.mxu0 0.0
    %489 = vmatmul.mubr.f32.gmra.mxu0 %v419
    %v490 = vpop.f32.mrf.mxu0
    %v491 = vadd.f32 0.0, %v490
    %v492 = vpop.f32.mrf.mxu0
    %493 = vdwg.mxu0
    %v494 = vmul.f32 %v491, 0.25
    %vm495 = vcmask 64512
    %v496 = vsel %vm495, %v494, -inf
    %497 = vmax.xlane.f32.xlu0 %v496
    %v498 = vpop.xlane.xlu0 %497
    %v499 = vsub.f32 %v494, %v498
    %v500 = vmul.f32 %v499, 1.442695
    %v501 = vpow.pop %v500
    %v502 = vsel %vm495, %v501, 0.0
    %503 = vadd.xlane.f32.xlu0 %v502
    %v504 = vpop.xlane.xlu0 %503
    %v505 = vrcp.pop %v504
    %v507 = vsel %vm495, %v501, 0
    %509 = vmatprep.subr.mxu0 0.0
    %510 = vmatpush1.msra.mxu0 0.0
    %511 = vmatprep.subr.mxu0 0.0
    %512 = vmatpush1.msra.mxu0 0.0
    %513 = vmatprep.subr.mxu0 0.0
    %514 = vmatpush1.msra.mxu0 0.0
    %515 = vmatprep.subr.mxu0 0.0
    %516 = vmatpush1.msra.mxu0 0.0
    %517 = vmatprep.subr.mxu0 0.0
    %518 = vmatpush1.msra.mxu0 0.0
    %519 = vmatprep.subr.mxu0 0.0
    %520 = vmatpush1.msra.mxu0 0.0
    %521 = vmatprep.subr.mxu0 0.0
    %522 = vmatpush1.msra.mxu0 0.0
    %523 = vmatprep.subr.mxu0 0.0
    %524 = vmatpush1.msra.mxu0 0.0
    %525 = vmatprep.subr.mxu0 0.0
    %526 = vmatpush1.msra.mxu0 0.0
    %527 = vmatprep.subr.mxu0 0.0
    %528 = vmatpush1.msra.mxu0 0.0
    %529 = vmatprep.subr.mxu0 0.0
    %530 = vmatpush1.msra.mxu0 0.0
    %531 = vmatprep.subr.mxu0 0.0
    %532 = vmatpush1.msra.mxu0 0.0
    %533 = vmatprep.subr.mxu0 0.0
    %534 = vmatpush1.msra.mxu0 0.0
    %535 = vmatprep.subr.mxu0 0.0
    %536 = vmatpush1.msra.mxu0 0.0
    %537 = vmatprep.subr.mxu0 0.0
    %538 = vmatpush1.msra.mxu0 0.0
    %539 = vmatprep.subr.mxu0 0.0
    %540 = vmatpush1.msra.mxu0 %v409
    %541 = vmatprep.subr.mxu0 0.0
    %542 = vmatpush2.msra.mxu0 0.0
    %543 = vmatprep.subr.mxu0 0.0
    %544 = vmatpush2.msra.mxu0 0.0
    %545 = vmatprep.subr.mxu0 0.0
    %546 = vmatpush2.msra.mxu0 0.0
    %547 = vmatprep.subr.mxu0 0.0
    %548 = vmatpush2.msra.mxu0 0.0
    %549 = vmatprep.subr.mxu0 0.0
    %550 = vmatpush2.msra.mxu0 0.0
    %551 = vmatprep.subr.mxu0 0.0
    %552 = vmatpush2.msra.mxu0 0.0
    %553 = vmatprep.subr.mxu0 0.0
    %554 = vmatpush2.msra.mxu0 0.0
    %555 = vmatprep.subr.mxu0 0.0
    %556 = vmatpush2.msra.mxu0 0.0
    %557 = vmatprep.subr.mxu0 0.0
    %558 = vmatpush2.msra.mxu0 0.0
    %559 = vmatprep.subr.mxu0 0.0
    %560 = vmatpush2.msra.mxu0 0.0
    %561 = vmatprep.subr.mxu0 0.0
    %562 = vmatpush2.msra.mxu0 0.0
    %563 = vmatprep.subr.mxu0 0.0
    %564 = vmatpush2.msra.mxu0 0.0
    %565 = vmatprep.subr.mxu0 0.0
    %566 = vmatpush2.msra.mxu0 0.0
    %567 = vmatprep.subr.mxu0 0.0
    %568 = vmatpush2.msra.mxu0 0.0
    %569 = vmatprep.subr.mxu0 0.0
    %570 = vmatpush2.msra.mxu0 0.0
    %571 = vmatprep.subr.mxu0 0.0
    %572 = vmatpush2.msra.mxu0 0.0
    %573 = vmatprep.mubr.f32.mxu0 0.0
    %574 = vmatmul.mubr.f32.gmra.mxu0 %v507
    %v575 = vpop.f32.mrf.mxu0
    %v576 = vadd.f32 0.0, %v575
    %v577 = vpop.f32.mrf.mxu0
    %578 = vdwg.mxu0
    %v579 = vmul.f32 %v576, %v505
    %580 = vrot.lane.b32.xlu0 %v225, 112
    %v581 = vpop.permute.xlu0 %580
    %582 = vrot.lane.b32.xlu0 %v317, 112
    %v583 = vpop.permute.xlu0 %582
    %v584 = vsel %vm417, %v581, 0
    %v586 = vsel %vm417, %v583, 0
    %588 = vmatprep.subr.mxu0 0.0
    %589 = vmatpush1.xpose.msra.mxu0 0.0
    %590 = vmatprep.subr.mxu0 0.0
    %591 = vmatpush1.xpose.msra.mxu0 0.0
    %592 = vmatprep.subr.mxu0 0.0
    %593 = vmatpush1.xpose.msra.mxu0 0.0
    %594 = vmatprep.subr.mxu0 0.0
    %595 = vmatpush1.xpose.msra.mxu0 0.0
    %596 = vmatprep.subr.mxu0 0.0
    %597 = vmatpush1.xpose.msra.mxu0 0.0
    %598 = vmatprep.subr.mxu0 0.0
    %599 = vmatpush1.xpose.msra.mxu0 0.0
    %600 = vmatprep.subr.mxu0 0.0
    %601 = vmatpush1.xpose.msra.mxu0 0.0
    %602 = vmatprep.subr.mxu0 0.0
    %603 = vmatpush1.xpose.msra.mxu0 0.0
    %604 = vmatprep.subr.mxu0 0.0
    %605 = vmatpush1.xpose.msra.mxu0 0.0
    %606 = vmatprep.subr.mxu0 0.0
    %607 = vmatpush1.xpose.msra.mxu0 0.0
    %608 = vmatprep.subr.mxu0 0.0
    %609 = vmatpush1.xpose.msra.mxu0 0.0
    %610 = vmatprep.subr.mxu0 0.0
    %611 = vmatpush1.xpose.msra.mxu0 0.0
    %612 = vmatprep.subr.mxu0 0.0
    %613 = vmatpush1.xpose.msra.mxu0 0.0
    %614 = vmatprep.subr.mxu0 0.0
    %615 = vmatpush1.xpose.msra.mxu0 0.0
    %616 = vmatprep.subr.mxu0 0.0
    %617 = vmatpush1.xpose.msra.mxu0 0.0
    %618 = vmatprep.subr.mxu0 0.0
    %619 = vmatpush1.xpose.msra.mxu0 %v586
    %620 = vmatprep.subr.mxu0 0.0
    %621 = vmatpush2.xpose.msra.mxu0 0.0
    %622 = vmatprep.subr.mxu0 0.0
    %623 = vmatpush2.xpose.msra.mxu0 0.0
    %624 = vmatprep.subr.mxu0 0.0
    %625 = vmatpush2.xpose.msra.mxu0 0.0
    %626 = vmatprep.subr.mxu0 0.0
    %627 = vmatpush2.xpose.msra.mxu0 0.0
    %628 = vmatprep.subr.mxu0 0.0
    %629 = vmatpush2.xpose.msra.mxu0 0.0
    %630 = vmatprep.subr.mxu0 0.0
    %631 = vmatpush2.xpose.msra.mxu0 0.0
    %632 = vmatprep.subr.mxu0 0.0
    %633 = vmatpush2.xpose.msra.mxu0 0.0
    %634 = vmatprep.subr.mxu0 0.0
    %635 = vmatpush2.xpose.msra.mxu0 0.0
    %636 = vmatprep.subr.mxu0 0.0
    %637 = vmatpush2.xpose.msra.mxu0 0.0
    %638 = vmatprep.subr.mxu0 0.0
    %639 = vmatpush2.xpose.msra.mxu0 0.0
    %640 = vmatprep.subr.mxu0 0.0
    %641 = vmatpush2.xpose.msra.mxu0 0.0
    %642 = vmatprep.subr.mxu0 0.0
    %643 = vmatpush2.xpose.msra.mxu0 0.0
    %644 = vmatprep.subr.mxu0 0.0
    %645 = vmatpush2.xpose.msra.mxu0 0.0
    %646 = vmatprep.subr.mxu0 0.0
    %647 = vmatpush2.xpose.msra.mxu0 0.0
    %648 = vmatprep.subr.mxu0 0.0
    %649 = vmatpush2.xpose.msra.mxu0 0.0
    %650 = vmatprep.subr.mxu0 0.0
    %651 = vmatpush2.xpose.msra.mxu0 0.0
    %652 = vmatprep.mubr.f32.mxu0 0.0
    %653 = vmatmul.mubr.f32.gmra.mxu0 %v584
    %v654 = vpop.f32.mrf.mxu0
    %v655 = vadd.f32 0.0, %v654
    %v656 = vpop.f32.mrf.mxu0
    %657 = vdwg.mxu0
    %v658 = vmul.f32 %v655, 0.25
    %v659 = vsel %vm495, %v658, -inf
    %660 = vmax.xlane.f32.xlu0 %v659
    %v661 = vpop.xlane.xlu0 %660
    %v662 = vsub.f32 %v658, %v661
    %v663 = vmul.f32 %v662, 1.442695
    %v664 = vpow.pop %v663
    %v665 = vsel %vm495, %v664, 0.0
    %666 = vadd.xlane.f32.xlu0 %v665
    %v667 = vpop.xlane.xlu0 %666
    %v668 = vrcp.pop %v667
    %670 = vrot.lane.b32.xlu0 %v409, 112
    %v671 = vpop.permute.xlu0 %670
    %v674 = vsel %vm495, %v664, 0
    %676 = vmatprep.subr.mxu0 0.0
    %677 = vmatpush1.msra.mxu0 0.0
    %678 = vmatprep.subr.mxu0 0.0
    %679 = vmatpush1.msra.mxu0 0.0
    %680 = vmatprep.subr.mxu0 0.0
    %681 = vmatpush1.msra.mxu0 0.0
    %682 = vmatprep.subr.mxu0 0.0
    %683 = vmatpush1.msra.mxu0 0.0
    %684 = vmatprep.subr.mxu0 0.0
    %685 = vmatpush1.msra.mxu0 0.0
    %686 = vmatprep.subr.mxu0 0.0
    %687 = vmatpush1.msra.mxu0 0.0
    %688 = vmatprep.subr.mxu0 0.0
    %689 = vmatpush1.msra.mxu0 0.0
    %690 = vmatprep.subr.mxu0 0.0
    %691 = vmatpush1.msra.mxu0 0.0
    %692 = vmatprep.subr.mxu0 0.0
    %693 = vmatpush1.msra.mxu0 0.0
    %694 = vmatprep.subr.mxu0 0.0
    %695 = vmatpush1.msra.mxu0 0.0
    %696 = vmatprep.subr.mxu0 0.0
    %697 = vmatpush1.msra.mxu0 0.0
    %698 = vmatprep.subr.mxu0 0.0
    %699 = vmatpush1.msra.mxu0 0.0
    %700 = vmatprep.subr.mxu0 0.0
    %701 = vmatpush1.msra.mxu0 0.0
    %702 = vmatprep.subr.mxu0 0.0
    %703 = vmatpush1.msra.mxu0 0.0
    %704 = vmatprep.subr.mxu0 0.0
    %705 = vmatpush1.msra.mxu0 0.0
    %706 = vmatprep.subr.mxu0 0.0
    %707 = vmatpush1.msra.mxu0 %v671
    %708 = vmatprep.subr.mxu0 0.0
    %709 = vmatpush2.msra.mxu0 0.0
    %710 = vmatprep.subr.mxu0 0.0
    %711 = vmatpush2.msra.mxu0 0.0
    %712 = vmatprep.subr.mxu0 0.0
    %713 = vmatpush2.msra.mxu0 0.0
    %714 = vmatprep.subr.mxu0 0.0
    %715 = vmatpush2.msra.mxu0 0.0
    %716 = vmatprep.subr.mxu0 0.0
    %717 = vmatpush2.msra.mxu0 0.0
    %718 = vmatprep.subr.mxu0 0.0
    %719 = vmatpush2.msra.mxu0 0.0
    %720 = vmatprep.subr.mxu0 0.0
    %721 = vmatpush2.msra.mxu0 0.0
    %722 = vmatprep.subr.mxu0 0.0
    %723 = vmatpush2.msra.mxu0 0.0
    %724 = vmatprep.subr.mxu0 0.0
    %725 = vmatpush2.msra.mxu0 0.0
    %726 = vmatprep.subr.mxu0 0.0
    %727 = vmatpush2.msra.mxu0 0.0
    %728 = vmatprep.subr.mxu0 0.0
    %729 = vmatpush2.msra.mxu0 0.0
    %730 = vmatprep.subr.mxu0 0.0
    %731 = vmatpush2.msra.mxu0 0.0
    %732 = vmatprep.subr.mxu0 0.0
    %733 = vmatpush2.msra.mxu0 0.0
    %734 = vmatprep.subr.mxu0 0.0
    %735 = vmatpush2.msra.mxu0 0.0
    %736 = vmatprep.subr.mxu0 0.0
    %737 = vmatpush2.msra.mxu0 0.0
    %738 = vmatprep.subr.mxu0 0.0
    %739 = vmatpush2.msra.mxu0 0.0
    %740 = vmatprep.mubr.f32.mxu0 0.0
    %741 = vmatmul.mubr.f32.gmra.mxu0 %v674
    %v742 = vpop.f32.mrf.mxu0
    %v743 = vadd.f32 0.0, %v742
    %v744 = vpop.f32.mrf.mxu0
    %745 = vdwg.mxu0
    %v746 = vmul.f32 %v743, %v668
    %747 = vrot.lane.b32.xlu0 %v225, 96
    %v748 = vpop.permute.xlu0 %747
    %749 = vrot.lane.b32.xlu0 %v317, 96
    %v750 = vpop.permute.xlu0 %749
    %v751 = vsel %vm417, %v748, 0
    %v753 = vsel %vm417, %v750, 0
    %755 = vmatprep.subr.mxu0 0.0
    %756 = vmatpush1.xpose.msra.mxu0 0.0
    %757 = vmatprep.subr.mxu0 0.0
    %758 = vmatpush1.xpose.msra.mxu0 0.0
    %759 = vmatprep.subr.mxu0 0.0
    %760 = vmatpush1.xpose.msra.mxu0 0.0
    %761 = vmatprep.subr.mxu0 0.0
    %762 = vmatpush1.xpose.msra.mxu0 0.0
    %763 = vmatprep.subr.mxu0 0.0
    %764 = vmatpush1.xpose.msra.mxu0 0.0
    %765 = vmatprep.subr.mxu0 0.0
    %766 = vmatpush1.xpose.msra.mxu0 0.0
    %767 = vmatprep.subr.mxu0 0.0
    %768 = vmatpush1.xpose.msra.mxu0 0.0
    %769 = vmatprep.subr.mxu0 0.0
    %770 = vmatpush1.xpose.msra.mxu0 0.0
    %771 = vmatprep.subr.mxu0 0.0
    %772 = vmatpush1.xpose.msra.mxu0 0.0
    %773 = vmatprep.subr.mxu0 0.0
    %774 = vmatpush1.xpose.msra.mxu0 0.0
    %775 = vmatprep.subr.mxu0 0.0
    %776 = vmatpush1.xpose.msra.mxu0 0.0
    %777 = vmatprep.subr.mxu0 0.0
    %778 = vmatpush1.xpose.msra.mxu0 0.0
    %779 = vmatprep.subr.mxu0 0.0
    %780 = vmatpush1.xpose.msra.mxu0 0.0
    %781 = vmatprep.subr.mxu0 0.0
    %782 = vmatpush1.xpose.msra.mxu0 0.0
    %783 = vmatprep.subr.mxu0 0.0
    %784 = vmatpush1.xpose.msra.mxu0 0.0
    %785 = vmatprep.subr.mxu0 0.0
    %786 = vmatpush1.xpose.msra.mxu0 %v753
    %787 = vmatprep.subr.mxu0 0.0
    %788 = vmatpush2.xpose.msra.mxu0 0.0
    %789 = vmatprep.subr.mxu0 0.0
    %790 = vmatpush2.xpose.msra.mxu0 0.0
    %791 = vmatprep.subr.mxu0 0.0
    %792 = vmatpush2.xpose.msra.mxu0 0.0
    %793 = vmatprep.subr.mxu0 0.0
    %794 = vmatpush2.xpose.msra.mxu0 0.0
    %795 = vmatprep.subr.mxu0 0.0
    %796 = vmatpush2.xpose.msra.mxu0 0.0
    %797 = vmatprep.subr.mxu0 0.0
    %798 = vmatpush2.xpose.msra.mxu0 0.0
    %799 = vmatprep.subr.mxu0 0.0
    %800 = vmatpush2.xpose.msra.mxu0 0.0
    %801 = vmatprep.subr.mxu0 0.0
    %802 = vmatpush2.xpose.msra.mxu0 0.0
    %803 = vmatprep.subr.mxu0 0.0
    %804 = vmatpush2.xpose.msra.mxu0 0.0
    %805 = vmatprep.subr.mxu0 0.0
    %806 = vmatpush2.xpose.msra.mxu0 0.0
    %807 = vmatprep.subr.mxu0 0.0
    %808 = vmatpush2.xpose.msra.mxu0 0.0
    %809 = vmatprep.subr.mxu0 0.0
    %810 = vmatpush2.xpose.msra.mxu0 0.0
    %811 = vmatprep.subr.mxu0 0.0
    %812 = vmatpush2.xpose.msra.mxu0 0.0
    %813 = vmatprep.subr.mxu0 0.0
    %814 = vmatpush2.xpose.msra.mxu0 0.0
    %815 = vmatprep.subr.mxu0 0.0
    %816 = vmatpush2.xpose.msra.mxu0 0.0
    %817 = vmatprep.subr.mxu0 0.0
    %818 = vmatpush2.xpose.msra.mxu0 0.0
    %819 = vmatprep.mubr.f32.mxu0 0.0
    %820 = vmatmul.mubr.f32.gmra.mxu0 %v751
    %v821 = vpop.f32.mrf.mxu0
    %v822 = vadd.f32 0.0, %v821
    %v823 = vpop.f32.mrf.mxu0
    %824 = vdwg.mxu0
    %v825 = vmul.f32 %v822, 0.25
    %v826 = vsel %vm495, %v825, -inf
    %827 = vmax.xlane.f32.xlu0 %v826
    %v828 = vpop.xlane.xlu0 %827
    %v829 = vsub.f32 %v825, %v828
    %v830 = vmul.f32 %v829, 1.442695
    %v831 = vpow.pop %v830
    %v832 = vsel %vm495, %v831, 0.0
    %833 = vadd.xlane.f32.xlu0 %v832
    %v834 = vpop.xlane.xlu0 %833
    %v835 = vrcp.pop %v834
    %836 = vrot.lane.b32.xlu0 %v409, 96
    %v837 = vpop.permute.xlu0 %836
    %v840 = vsel %vm495, %v831, 0
    %842 = vmatprep.subr.mxu0 0.0
    %843 = vmatpush1.msra.mxu0 0.0
    %844 = vmatprep.subr.mxu0 0.0
    %845 = vmatpush1.msra.mxu0 0.0
    %846 = vmatprep.subr.mxu0 0.0
    %847 = vmatpush1.msra.mxu0 0.0
    %848 = vmatprep.subr.mxu0 0.0
    %849 = vmatpush1.msra.mxu0 0.0
    %850 = vmatprep.subr.mxu0 0.0
    %851 = vmatpush1.msra.mxu0 0.0
    %852 = vmatprep.subr.mxu0 0.0
    %853 = vmatpush1.msra.mxu0 0.0
    %854 = vmatprep.subr.mxu0 0.0
    %855 = vmatpush1.msra.mxu0 0.0
    %856 = vmatprep.subr.mxu0 0.0
    %857 = vmatpush1.msra.mxu0 0.0
    %858 = vmatprep.subr.mxu0 0.0
    %859 = vmatpush1.msra.mxu0 0.0
    %860 = vmatprep.subr.mxu0 0.0
    %861 = vmatpush1.msra.mxu0 0.0
    %862 = vmatprep.subr.mxu0 0.0
    %863 = vmatpush1.msra.mxu0 0.0
    %864 = vmatprep.subr.mxu0 0.0
    %865 = vmatpush1.msra.mxu0 0.0
    %866 = vmatprep.subr.mxu0 0.0
    %867 = vmatpush1.msra.mxu0 0.0
    %868 = vmatprep.subr.mxu0 0.0
    %869 = vmatpush1.msra.mxu0 0.0
    %870 = vmatprep.subr.mxu0 0.0
    %871 = vmatpush1.msra.mxu0 0.0
    %872 = vmatprep.subr.mxu0 0.0
    %873 = vmatpush1.msra.mxu0 %v837
    %874 = vmatprep.subr.mxu0 0.0
    %875 = vmatpush2.msra.mxu0 0.0
    %876 = vmatprep.subr.mxu0 0.0
    %877 = vmatpush2.msra.mxu0 0.0
    %878 = vmatprep.subr.mxu0 0.0
    %879 = vmatpush2.msra.mxu0 0.0
    %880 = vmatprep.subr.mxu0 0.0
    %881 = vmatpush2.msra.mxu0 0.0
    %882 = vmatprep.subr.mxu0 0.0
    %883 = vmatpush2.msra.mxu0 0.0
    %884 = vmatprep.subr.mxu0 0.0
    %885 = vmatpush2.msra.mxu0 0.0
    %886 = vmatprep.subr.mxu0 0.0
    %887 = vmatpush2.msra.mxu0 0.0
    %888 = vmatprep.subr.mxu0 0.0
    %889 = vmatpush2.msra.mxu0 0.0
    %890 = vmatprep.subr.mxu0 0.0
    %891 = vmatpush2.msra.mxu0 0.0
    %892 = vmatprep.subr.mxu0 0.0
    %893 = vmatpush2.msra.mxu0 0.0
    %894 = vmatprep.subr.mxu0 0.0
    %895 = vmatpush2.msra.mxu0 0.0
    %896 = vmatprep.subr.mxu0 0.0
    %897 = vmatpush2.msra.mxu0 0.0
    %898 = vmatprep.subr.mxu0 0.0
    %899 = vmatpush2.msra.mxu0 0.0
    %900 = vmatprep.subr.mxu0 0.0
    %901 = vmatpush2.msra.mxu0 0.0
    %902 = vmatprep.subr.mxu0 0.0
    %903 = vmatpush2.msra.mxu0 0.0
    %904 = vmatprep.subr.mxu0 0.0
    %905 = vmatpush2.msra.mxu0 0.0
    %906 = vmatprep.mubr.f32.mxu0 0.0
    %907 = vmatmul.mubr.f32.gmra.mxu0 %v840
    %v908 = vpop.f32.mrf.mxu0
    %v909 = vadd.f32 0.0, %v908
    %v910 = vpop.f32.mrf.mxu0
    %911 = vdwg.mxu0
    %v912 = vmul.f32 %v909, %v835
    %913 = vrot.lane.b32.xlu0 %v225, 80
    %v914 = vpop.permute.xlu0 %913
    %915 = vrot.lane.b32.xlu0 %v317, 80
    %v916 = vpop.permute.xlu0 %915
    %v917 = vsel %vm417, %v914, 0
    %v919 = vsel %vm417, %v916, 0
    %921 = vmatprep.subr.mxu0 0.0
    %922 = vmatpush1.xpose.msra.mxu0 0.0
    %923 = vmatprep.subr.mxu0 0.0
    %924 = vmatpush1.xpose.msra.mxu0 0.0
    %925 = vmatprep.subr.mxu0 0.0
    %926 = vmatpush1.xpose.msra.mxu0 0.0
    %927 = vmatprep.subr.mxu0 0.0
    %928 = vmatpush1.xpose.msra.mxu0 0.0
    %929 = vmatprep.subr.mxu0 0.0
    %930 = vmatpush1.xpose.msra.mxu0 0.0
    %931 = vmatprep.subr.mxu0 0.0
    %932 = vmatpush1.xpose.msra.mxu0 0.0
    %933 = vmatprep.subr.mxu0 0.0
    %934 = vmatpush1.xpose.msra.mxu0 0.0
    %935 = vmatprep.subr.mxu0 0.0
    %936 = vmatpush1.xpose.msra.mxu0 0.0
    %937 = vmatprep.subr.mxu0 0.0
    %938 = vmatpush1.xpose.msra.mxu0 0.0
    %939 = vmatprep.subr.mxu0 0.0
    %940 = vmatpush1.xpose.msra.mxu0 0.0
    %941 = vmatprep.subr.mxu0 0.0
    %942 = vmatpush1.xpose.msra.mxu0 0.0
    %943 = vmatprep.subr.mxu0 0.0
    %944 = vmatpush1.xpose.msra.mxu0 0.0
    %945 = vmatprep.subr.mxu0 0.0
    %946 = vmatpush1.xpose.msra.mxu0 0.0
    %947 = vmatprep.subr.mxu0 0.0
    %948 = vmatpush1.xpose.msra.mxu0 0.0
    %949 = vmatprep.subr.mxu0 0.0
    %950 = vmatpush1.xpose.msra.mxu0 0.0
    %951 = vmatprep.subr.mxu0 0.0
    %952 = vmatpush1.xpose.msra.mxu0 %v919
    %953 = vmatprep.subr.mxu0 0.0
    %954 = vmatpush2.xpose.msra.mxu0 0.0
    %955 = vmatprep.subr.mxu0 0.0
    %956 = vmatpush2.xpose.msra.mxu0 0.0
    %957 = vmatprep.subr.mxu0 0.0
    %958 = vmatpush2.xpose.msra.mxu0 0.0
    %959 = vmatprep.subr.mxu0 0.0
    %960 = vmatpush2.xpose.msra.mxu0 0.0
    %961 = vmatprep.subr.mxu0 0.0
    %962 = vmatpush2.xpose.msra.mxu0 0.0
    %963 = vmatprep.subr.mxu0 0.0
    %964 = vmatpush2.xpose.msra.mxu0 0.0
    %965 = vmatprep.subr.mxu0 0.0
    %966 = vmatpush2.xpose.msra.mxu0 0.0
    %967 = vmatprep.subr.mxu0 0.0
    %968 = vmatpush2.xpose.msra.mxu0 0.0
    %969 = vmatprep.subr.mxu0 0.0
    %970 = vmatpush2.xpose.msra.mxu0 0.0
    %971 = vmatprep.subr.mxu0 0.0
    %972 = vmatpush2.xpose.msra.mxu0 0.0
    %973 = vmatprep.subr.mxu0 0.0
    %974 = vmatpush2.xpose.msra.mxu0 0.0
    %975 = vmatprep.subr.mxu0 0.0
    %976 = vmatpush2.xpose.msra.mxu0 0.0
    %977 = vmatprep.subr.mxu0 0.0
    %978 = vmatpush2.xpose.msra.mxu0 0.0
    %979 = vmatprep.subr.mxu0 0.0
    %980 = vmatpush2.xpose.msra.mxu0 0.0
    %981 = vmatprep.subr.mxu0 0.0
    %982 = vmatpush2.xpose.msra.mxu0 0.0
    %983 = vmatprep.subr.mxu0 0.0
    %984 = vmatpush2.xpose.msra.mxu0 0.0
    %985 = vmatprep.mubr.f32.mxu0 0.0
    %986 = vmatmul.mubr.f32.gmra.mxu0 %v917
    %v987 = vpop.f32.mrf.mxu0
    %v988 = vadd.f32 0.0, %v987
    %v989 = vpop.f32.mrf.mxu0
    %990 = vdwg.mxu0
    %v991 = vmul.f32 %v988, 0.25
    %v992 = vsel %vm495, %v991, -inf
    %993 = vmax.xlane.f32.xlu0 %v992
    %v994 = vpop.xlane.xlu0 %993
    %v995 = vsub.f32 %v991, %v994
    %v996 = vmul.f32 %v995, 1.442695
    %v997 = vpow.pop %v996
    %v998 = vsel %vm495, %v997, 0.0
    %999 = vadd.xlane.f32.xlu0 %v998
    %v1000 = vpop.xlane.xlu0 %999
    %v1001 = vrcp.pop %v1000
    %1002 = vrot.lane.b32.xlu0 %v409, 80
    %v1003 = vpop.permute.xlu0 %1002
    %v1006 = vsel %vm495, %v997, 0
    %1008 = vmatprep.subr.mxu0 0.0
    %1009 = vmatpush1.msra.mxu0 0.0
    %1010 = vmatprep.subr.mxu0 0.0
    %1011 = vmatpush1.msra.mxu0 0.0
    %1012 = vmatprep.subr.mxu0 0.0
    %1013 = vmatpush1.msra.mxu0 0.0
    %1014 = vmatprep.subr.mxu0 0.0
    %1015 = vmatpush1.msra.mxu0 0.0
    %1016 = vmatprep.subr.mxu0 0.0
    %1017 = vmatpush1.msra.mxu0 0.0
    %1018 = vmatprep.subr.mxu0 0.0
    %1019 = vmatpush1.msra.mxu0 0.0
    %1020 = vmatprep.subr.mxu0 0.0
    %1021 = vmatpush1.msra.mxu0 0.0
    %1022 = vmatprep.subr.mxu0 0.0
    %1023 = vmatpush1.msra.mxu0 0.0
    %1024 = vmatprep.subr.mxu0 0.0
    %1025 = vmatpush1.msra.mxu0 0.0
    %1026 = vmatprep.subr.mxu0 0.0
    %1027 = vmatpush1.msra.mxu0 0.0
    %1028 = vmatprep.subr.mxu0 0.0
    %1029 = vmatpush1.msra.mxu0 0.0
    %1030 = vmatprep.subr.mxu0 0.0
    %1031 = vmatpush1.msra.mxu0 0.0
    %1032 = vmatprep.subr.mxu0 0.0
    %1033 = vmatpush1.msra.mxu0 0.0
    %1034 = vmatprep.subr.mxu0 0.0
    %1035 = vmatpush1.msra.mxu0 0.0
    %1036 = vmatprep.subr.mxu0 0.0
    %1037 = vmatpush1.msra.mxu0 0.0
    %1038 = vmatprep.subr.mxu0 0.0
    %1039 = vmatpush1.msra.mxu0 %v1003
    %1040 = vmatprep.subr.mxu0 0.0
    %1041 = vmatpush2.msra.mxu0 0.0
    %1042 = vmatprep.subr.mxu0 0.0
    %1043 = vmatpush2.msra.mxu0 0.0
    %1044 = vmatprep.subr.mxu0 0.0
    %1045 = vmatpush2.msra.mxu0 0.0
    %1046 = vmatprep.subr.mxu0 0.0
    %1047 = vmatpush2.msra.mxu0 0.0
    %1048 = vmatprep.subr.mxu0 0.0
    %1049 = vmatpush2.msra.mxu0 0.0
    %1050 = vmatprep.subr.mxu0 0.0
    %1051 = vmatpush2.msra.mxu0 0.0
    %1052 = vmatprep.subr.mxu0 0.0
    %1053 = vmatpush2.msra.mxu0 0.0
    %1054 = vmatprep.subr.mxu0 0.0
    %1055 = vmatpush2.msra.mxu0 0.0
    %1056 = vmatprep.subr.mxu0 0.0
    %1057 = vmatpush2.msra.mxu0 0.0
    %1058 = vmatprep.subr.mxu0 0.0
    %1059 = vmatpush2.msra.mxu0 0.0
    %1060 = vmatprep.subr.mxu0 0.0
    %1061 = vmatpush2.msra.mxu0 0.0
    %1062 = vmatprep.subr.mxu0 0.0
    %1063 = vmatpush2.msra.mxu0 0.0
    %1064 = vmatprep.subr.mxu0 0.0
    %1065 = vmatpush2.msra.mxu0 0.0
    %1066 = vmatprep.subr.mxu0 0.0
    %1067 = vmatpush2.msra.mxu0 0.0
    %1068 = vmatprep.subr.mxu0 0.0
    %1069 = vmatpush2.msra.mxu0 0.0
    %1070 = vmatprep.subr.mxu0 0.0
    %1071 = vmatpush2.msra.mxu0 0.0
    %1072 = vmatprep.mubr.f32.mxu0 0.0
    %1073 = vmatmul.mubr.f32.gmra.mxu0 %v1006
    %v1074 = vpop.f32.mrf.mxu0
    %v1075 = vadd.f32 0.0, %v1074
    %v1076 = vpop.f32.mrf.mxu0
    %1077 = vdwg.mxu0
    %v1078 = vmul.f32 %v1075, %v1001
    %1080 = vrot.lane.b32.xlu0 %v746, 16
    %v1081 = vpop.permute.xlu0 %1080
    %1084 = vrot.lane.b32.xlu0 %v912, 32
    %v1085 = vpop.permute.xlu0 %1084
    %1088 = vrot.lane.b32.xlu0 %v1078, 48
    %v1089 = vpop.permute.xlu0 %1088
    %v1091 = vsel %vm417, %v579, %v1081
    %v1092 = vsel %vm151, %v1091, %v1085
    %vm1093 = vcmask 392192
    %v1094 = vsel %vm1093, %v1092, %v1089
    %v1096 = vsel %vm417, %v230, 0
    %v1099 = vsel %vm417, %v322, 0
    %1101 = vmatprep.subr.mxu0 0.0
    %1102 = vmatpush1.xpose.msra.mxu0 0.0
    %1103 = vmatprep.subr.mxu0 0.0
    %1104 = vmatpush1.xpose.msra.mxu0 0.0
    %1105 = vmatprep.subr.mxu0 0.0
    %1106 = vmatpush1.xpose.msra.mxu0 0.0
    %1107 = vmatprep.subr.mxu0 0.0
    %1108 = vmatpush1.xpose.msra.mxu0 0.0
    %1109 = vmatprep.subr.mxu0 0.0
    %1110 = vmatpush1.xpose.msra.mxu0 0.0
    %1111 = vmatprep.subr.mxu0 0.0
    %1112 = vmatpush1.xpose.msra.mxu0 0.0
    %1113 = vmatprep.subr.mxu0 0.0
    %1114 = vmatpush1.xpose.msra.mxu0 0.0
    %1115 = vmatprep.subr.mxu0 0.0
    %1116 = vmatpush1.xpose.msra.mxu0 0.0
    %1117 = vmatprep.subr.mxu0 0.0
    %1118 = vmatpush1.xpose.msra.mxu0 0.0
    %1119 = vmatprep.subr.mxu0 0.0
    %1120 = vmatpush1.xpose.msra.mxu0 0.0
    %1121 = vmatprep.subr.mxu0 0.0
    %1122 = vmatpush1.xpose.msra.mxu0 0.0
    %1123 = vmatprep.subr.mxu0 0.0
    %1124 = vmatpush1.xpose.msra.mxu0 0.0
    %1125 = vmatprep.subr.mxu0 0.0
    %1126 = vmatpush1.xpose.msra.mxu0 0.0
    %1127 = vmatprep.subr.mxu0 0.0
    %1128 = vmatpush1.xpose.msra.mxu0 0.0
    %1129 = vmatprep.subr.mxu0 0.0
    %1130 = vmatpush1.xpose.msra.mxu0 0.0
    %1131 = vmatprep.subr.mxu0 0.0
    %1132 = vmatpush1.xpose.msra.mxu0 %v1099
    %1133 = vmatprep.subr.mxu0 0.0
    %1134 = vmatpush2.xpose.msra.mxu0 0.0
    %1135 = vmatprep.subr.mxu0 0.0
    %1136 = vmatpush2.xpose.msra.mxu0 0.0
    %1137 = vmatprep.subr.mxu0 0.0
    %1138 = vmatpush2.xpose.msra.mxu0 0.0
    %1139 = vmatprep.subr.mxu0 0.0
    %1140 = vmatpush2.xpose.msra.mxu0 0.0
    %1141 = vmatprep.subr.mxu0 0.0
    %1142 = vmatpush2.xpose.msra.mxu0 0.0
    %1143 = vmatprep.subr.mxu0 0.0
    %1144 = vmatpush2.xpose.msra.mxu0 0.0
    %1145 = vmatprep.subr.mxu0 0.0
    %1146 = vmatpush2.xpose.msra.mxu0 0.0
    %1147 = vmatprep.subr.mxu0 0.0
    %1148 = vmatpush2.xpose.msra.mxu0 0.0
    %1149 = vmatprep.subr.mxu0 0.0
    %1150 = vmatpush2.xpose.msra.mxu0 0.0
    %1151 = vmatprep.subr.mxu0 0.0
    %1152 = vmatpush2.xpose.msra.mxu0 0.0
    %1153 = vmatprep.subr.mxu0 0.0
    %1154 = vmatpush2.xpose.msra.mxu0 0.0
    %1155 = vmatprep.subr.mxu0 0.0
    %1156 = vmatpush2.xpose.msra.mxu0 0.0
    %1157 = vmatprep.subr.mxu0 0.0
    %1158 = vmatpush2.xpose.msra.mxu0 0.0
    %1159 = vmatprep.subr.mxu0 0.0
    %1160 = vmatpush2.xpose.msra.mxu0 0.0
    %1161 = vmatprep.subr.mxu0 0.0
    %1162 = vmatpush2.xpose.msra.mxu0 0.0
    %1163 = vmatprep.subr.mxu0 0.0
    %1164 = vmatpush2.xpose.msra.mxu0 0.0
    %1165 = vmatprep.mubr.f32.mxu0 0.0
    %1166 = vmatmul.mubr.f32.gmra.mxu0 %v1096
    %v1167 = vpop.f32.mrf.mxu0
    %v1168 = vadd.f32 0.0, %v1167
    %v1169 = vpop.f32.mrf.mxu0
    %1170 = vdwg.mxu0
    %v1171 = vmul.f32 %v1168, 0.25
    %v1172 = vsel %vm495, %v1171, -inf
    %1173 = vmax.xlane.f32.xlu0 %v1172
    %v1174 = vpop.xlane.xlu0 %1173
    %v1175 = vsub.f32 %v1171, %v1174
    %v1176 = vmul.f32 %v1175, 1.442695
    %v1177 = vpow.pop %v1176
    %v1178 = vsel %vm495, %v1177, 0.0
    %1179 = vadd.xlane.f32.xlu0 %v1178
    %v1180 = vpop.xlane.xlu0 %1179
    %v1181 = vrcp.pop %v1180
    %v1183 = vsel %vm495, %v1177, 0
    %1185 = vmatprep.subr.mxu0 0.0
    %1186 = vmatpush1.msra.mxu0 0.0
    %1187 = vmatprep.subr.mxu0 0.0
    %1188 = vmatpush1.msra.mxu0 0.0
    %1189 = vmatprep.subr.mxu0 0.0
    %1190 = vmatpush1.msra.mxu0 0.0
    %1191 = vmatprep.subr.mxu0 0.0
    %1192 = vmatpush1.msra.mxu0 0.0
    %1193 = vmatprep.subr.mxu0 0.0
    %1194 = vmatpush1.msra.mxu0 0.0
    %1195 = vmatprep.subr.mxu0 0.0
    %1196 = vmatpush1.msra.mxu0 0.0
    %1197 = vmatprep.subr.mxu0 0.0
    %1198 = vmatpush1.msra.mxu0 0.0
    %1199 = vmatprep.subr.mxu0 0.0
    %1200 = vmatpush1.msra.mxu0 0.0
    %1201 = vmatprep.subr.mxu0 0.0
    %1202 = vmatpush1.msra.mxu0 0.0
    %1203 = vmatprep.subr.mxu0 0.0
    %1204 = vmatpush1.msra.mxu0 0.0
    %1205 = vmatprep.subr.mxu0 0.0
    %1206 = vmatpush1.msra.mxu0 0.0
    %1207 = vmatprep.subr.mxu0 0.0
    %1208 = vmatpush1.msra.mxu0 0.0
    %1209 = vmatprep.subr.mxu0 0.0
    %1210 = vmatpush1.msra.mxu0 0.0
    %1211 = vmatprep.subr.mxu0 0.0
    %1212 = vmatpush1.msra.mxu0 0.0
    %1213 = vmatprep.subr.mxu0 0.0
    %1214 = vmatpush1.msra.mxu0 0.0
    %1215 = vmatprep.subr.mxu0 0.0
    %1216 = vmatpush1.msra.mxu0 %v414
    %1217 = vmatprep.subr.mxu0 0.0
    %1218 = vmatpush2.msra.mxu0 0.0
    %1219 = vmatprep.subr.mxu0 0.0
    %1220 = vmatpush2.msra.mxu0 0.0
    %1221 = vmatprep.subr.mxu0 0.0
    %1222 = vmatpush2.msra.mxu0 0.0
    %1223 = vmatprep.subr.mxu0 0.0
    %1224 = vmatpush2.msra.mxu0 0.0
    %1225 = vmatprep.subr.mxu0 0.0
    %1226 = vmatpush2.msra.mxu0 0.0
    %1227 = vmatprep.subr.mxu0 0.0
    %1228 = vmatpush2.msra.mxu0 0.0
    %1229 = vmatprep.subr.mxu0 0.0
    %1230 = vmatpush2.msra.mxu0 0.0
    %1231 = vmatprep.subr.mxu0 0.0
    %1232 = vmatpush2.msra.mxu0 0.0
    %1233 = vmatprep.subr.mxu0 0.0
    %1234 = vmatpush2.msra.mxu0 0.0
    %1235 = vmatprep.subr.mxu0 0.0
    %1236 = vmatpush2.msra.mxu0 0.0
    %1237 = vmatprep.subr.mxu0 0.0
    %1238 = vmatpush2.msra.mxu0 0.0
    %1239 = vmatprep.subr.mxu0 0.0
    %1240 = vmatpush2.msra.mxu0 0.0
    %1241 = vmatprep.subr.mxu0 0.0
    %1242 = vmatpush2.msra.mxu0 0.0
    %1243 = vmatprep.subr.mxu0 0.0
    %1244 = vmatpush2.msra.mxu0 0.0
    %1245 = vmatprep.subr.mxu0 0.0
    %1246 = vmatpush2.msra.mxu0 0.0
    %1247 = vmatprep.subr.mxu0 0.0
    %1248 = vmatpush2.msra.mxu0 0.0
    %1249 = vmatprep.mubr.f32.mxu0 0.0
    %1250 = vmatmul.mubr.f32.gmra.mxu0 %v1183
    %v1251 = vpop.f32.mrf.mxu0
    %v1252 = vadd.f32 0.0, %v1251
    %v1253 = vpop.f32.mrf.mxu0
    %1254 = vdwg.mxu0
    %v1255 = vmul.f32 %v1252, %v1181
    %1256 = vrot.lane.b32.xlu0 %v230, 112
    %v1257 = vpop.permute.xlu0 %1256
    %1258 = vrot.lane.b32.xlu0 %v322, 112
    %v1259 = vpop.permute.xlu0 %1258
    %v1260 = vsel %vm417, %v1257, 0
    %v1262 = vsel %vm417, %v1259, 0
    %1264 = vmatprep.subr.mxu0 0.0
    %1265 = vmatpush1.xpose.msra.mxu0 0.0
    %1266 = vmatprep.subr.mxu0 0.0
    %1267 = vmatpush1.xpose.msra.mxu0 0.0
    %1268 = vmatprep.subr.mxu0 0.0
    %1269 = vmatpush1.xpose.msra.mxu0 0.0
    %1270 = vmatprep.subr.mxu0 0.0
    %1271 = vmatpush1.xpose.msra.mxu0 0.0
    %1272 = vmatprep.subr.mxu0 0.0
    %1273 = vmatpush1.xpose.msra.mxu0 0.0
    %1274 = vmatprep.subr.mxu0 0.0
    %1275 = vmatpush1.xpose.msra.mxu0 0.0
    %1276 = vmatprep.subr.mxu0 0.0
    %1277 = vmatpush1.xpose.msra.mxu0 0.0
    %1278 = vmatprep.subr.mxu0 0.0
    %1279 = vmatpush1.xpose.msra.mxu0 0.0
    %1280 = vmatprep.subr.mxu0 0.0
    %1281 = vmatpush1.xpose.msra.mxu0 0.0
    %1282 = vmatprep.subr.mxu0 0.0
    %1283 = vmatpush1.xpose.msra.mxu0 0.0
    %1284 = vmatprep.subr.mxu0 0.0
    %1285 = vmatpush1.xpose.msra.mxu0 0.0
    %1286 = vmatprep.subr.mxu0 0.0
    %1287 = vmatpush1.xpose.msra.mxu0 0.0
    %1288 = vmatprep.subr.mxu0 0.0
    %1289 = vmatpush1.xpose.msra.mxu0 0.0
    %1290 = vmatprep.subr.mxu0 0.0
    %1291 = vmatpush1.xpose.msra.mxu0 0.0
    %1292 = vmatprep.subr.mxu0 0.0
    %1293 = vmatpush1.xpose.msra.mxu0 0.0
    %1294 = vmatprep.subr.mxu0 0.0
    %1295 = vmatpush1.xpose.msra.mxu0 %v1262
    %1296 = vmatprep.subr.mxu0 0.0
    %1297 = vmatpush2.xpose.msra.mxu0 0.0
    %1298 = vmatprep.subr.mxu0 0.0
    %1299 = vmatpush2.xpose.msra.mxu0 0.0
    %1300 = vmatprep.subr.mxu0 0.0
    %1301 = vmatpush2.xpose.msra.mxu0 0.0
    %1302 = vmatprep.subr.mxu0 0.0
    %1303 = vmatpush2.xpose.msra.mxu0 0.0
    %1304 = vmatprep.subr.mxu0 0.0
    %1305 = vmatpush2.xpose.msra.mxu0 0.0
    %1306 = vmatprep.subr.mxu0 0.0
    %1307 = vmatpush2.xpose.msra.mxu0 0.0
    %1308 = vmatprep.subr.mxu0 0.0
    %1309 = vmatpush2.xpose.msra.mxu0 0.0
    %1310 = vmatprep.subr.mxu0 0.0
    %1311 = vmatpush2.xpose.msra.mxu0 0.0
    %1312 = vmatprep.subr.mxu0 0.0
    %1313 = vmatpush2.xpose.msra.mxu0 0.0
    %1314 = vmatprep.subr.mxu0 0.0
    %1315 = vmatpush2.xpose.msra.mxu0 0.0
    %1316 = vmatprep.subr.mxu0 0.0
    %1317 = vmatpush2.xpose.msra.mxu0 0.0
    %1318 = vmatprep.subr.mxu0 0.0
    %1319 = vmatpush2.xpose.msra.mxu0 0.0
    %1320 = vmatprep.subr.mxu0 0.0
    %1321 = vmatpush2.xpose.msra.mxu0 0.0
    %1322 = vmatprep.subr.mxu0 0.0
    %1323 = vmatpush2.xpose.msra.mxu0 0.0
    %1324 = vmatprep.subr.mxu0 0.0
    %1325 = vmatpush2.xpose.msra.mxu0 0.0
    %1326 = vmatprep.subr.mxu0 0.0
    %1327 = vmatpush2.xpose.msra.mxu0 0.0
    %1328 = vmatprep.mubr.f32.mxu0 0.0
    %1329 = vmatmul.mubr.f32.gmra.mxu0 %v1260
    %v1330 = vpop.f32.mrf.mxu0
    %v1331 = vadd.f32 0.0, %v1330
    %v1332 = vpop.f32.mrf.mxu0
    %1333 = vdwg.mxu0
    %v1334 = vmul.f32 %v1331, 0.25
    %v1335 = vsel %vm495, %v1334, -inf
    %1336 = vmax.xlane.f32.xlu0 %v1335
    %v1337 = vpop.xlane.xlu0 %1336
    %v1338 = vsub.f32 %v1334, %v1337
    %v1339 = vmul.f32 %v1338, 1.442695
    %v1340 = vpow.pop %v1339
    %v1341 = vsel %vm495, %v1340, 0.0
    %1342 = vadd.xlane.f32.xlu0 %v1341
    %v1343 = vpop.xlane.xlu0 %1342
    %v1344 = vrcp.pop %v1343
    %1346 = vrot.lane.b32.xlu0 %v414, 112
    %v1347 = vpop.permute.xlu0 %1346
    %v1350 = vsel %vm495, %v1340, 0
    %1352 = vmatprep.subr.mxu0 0.0
    %1353 = vmatpush1.msra.mxu0 0.0
    %1354 = vmatprep.subr.mxu0 0.0
    %1355 = vmatpush1.msra.mxu0 0.0
    %1356 = vmatprep.subr.mxu0 0.0
    %1357 = vmatpush1.msra.mxu0 0.0
    %1358 = vmatprep.subr.mxu0 0.0
    %1359 = vmatpush1.msra.mxu0 0.0
    %1360 = vmatprep.subr.mxu0 0.0
    %1361 = vmatpush1.msra.mxu0 0.0
    %1362 = vmatprep.subr.mxu0 0.0
    %1363 = vmatpush1.msra.mxu0 0.0
    %1364 = vmatprep.subr.mxu0 0.0
    %1365 = vmatpush1.msra.mxu0 0.0
    %1366 = vmatprep.subr.mxu0 0.0
    %1367 = vmatpush1.msra.mxu0 0.0
    %1368 = vmatprep.subr.mxu0 0.0
    %1369 = vmatpush1.msra.mxu0 0.0
    %1370 = vmatprep.subr.mxu0 0.0
    %1371 = vmatpush1.msra.mxu0 0.0
    %1372 = vmatprep.subr.mxu0 0.0
    %1373 = vmatpush1.msra.mxu0 0.0
    %1374 = vmatprep.subr.mxu0 0.0
    %1375 = vmatpush1.msra.mxu0 0.0
    %1376 = vmatprep.subr.mxu0 0.0
    %1377 = vmatpush1.msra.mxu0 0.0
    %1378 = vmatprep.subr.mxu0 0.0
    %1379 = vmatpush1.msra.mxu0 0.0
    %1380 = vmatprep.subr.mxu0 0.0
    %1381 = vmatpush1.msra.mxu0 0.0
    %1382 = vmatprep.subr.mxu0 0.0
    %1383 = vmatpush1.msra.mxu0 %v1347
    %1384 = vmatprep.subr.mxu0 0.0
    %1385 = vmatpush2.msra.mxu0 0.0
    %1386 = vmatprep.subr.mxu0 0.0
    %1387 = vmatpush2.msra.mxu0 0.0
    %1388 = vmatprep.subr.mxu0 0.0
    %1389 = vmatpush2.msra.mxu0 0.0
    %1390 = vmatprep.subr.mxu0 0.0
    %1391 = vmatpush2.msra.mxu0 0.0
    %1392 = vmatprep.subr.mxu0 0.0
    %1393 = vmatpush2.msra.mxu0 0.0
    %1394 = vmatprep.subr.mxu0 0.0
    %1395 = vmatpush2.msra.mxu0 0.0
    %1396 = vmatprep.subr.mxu0 0.0
    %1397 = vmatpush2.msra.mxu0 0.0
    %1398 = vmatprep.subr.mxu0 0.0
    %1399 = vmatpush2.msra.mxu0 0.0
    %1400 = vmatprep.subr.mxu0 0.0
    %1401 = vmatpush2.msra.mxu0 0.0
    %1402 = vmatprep.subr.mxu0 0.0
    %1403 = vmatpush2.msra.mxu0 0.0
    %1404 = vmatprep.subr.mxu0 0.0
    %1405 = vmatpush2.msra.mxu0 0.0
    %1406 = vmatprep.subr.mxu0 0.0
    %1407 = vmatpush2.msra.mxu0 0.0
    %1408 = vmatprep.subr.mxu0 0.0
    %1409 = vmatpush2.msra.mxu0 0.0
    %1410 = vmatprep.subr.mxu0 0.0
    %1411 = vmatpush2.msra.mxu0 0.0
    %1412 = vmatprep.subr.mxu0 0.0
    %1413 = vmatpush2.msra.mxu0 0.0
    %1414 = vmatprep.subr.mxu0 0.0
    %1415 = vmatpush2.msra.mxu0 0.0
    %1416 = vmatprep.mubr.f32.mxu0 0.0
    %1417 = vmatmul.mubr.f32.gmra.mxu0 %v1350
    %v1418 = vpop.f32.mrf.mxu0
    %v1419 = vadd.f32 0.0, %v1418
    %v1420 = vpop.f32.mrf.mxu0
    %1421 = vdwg.mxu0
    %v1422 = vmul.f32 %v1419, %v1344
    %1423 = vrot.lane.b32.xlu0 %v230, 96
    %v1424 = vpop.permute.xlu0 %1423
    %1425 = vrot.lane.b32.xlu0 %v322, 96
    %v1426 = vpop.permute.xlu0 %1425
    %v1427 = vsel %vm417, %v1424, 0
    %v1429 = vsel %vm417, %v1426, 0
    %1431 = vmatprep.subr.mxu0 0.0
    %1432 = vmatpush1.xpose.msra.mxu0 0.0
    %1433 = vmatprep.subr.mxu0 0.0
    %1434 = vmatpush1.xpose.msra.mxu0 0.0
    %1435 = vmatprep.subr.mxu0 0.0
    %1436 = vmatpush1.xpose.msra.mxu0 0.0
    %1437 = vmatprep.subr.mxu0 0.0
    %1438 = vmatpush1.xpose.msra.mxu0 0.0
    %1439 = vmatprep.subr.mxu0 0.0
    %1440 = vmatpush1.xpose.msra.mxu0 0.0
    %1441 = vmatprep.subr.mxu0 0.0
    %1442 = vmatpush1.xpose.msra.mxu0 0.0
    %1443 = vmatprep.subr.mxu0 0.0
    %1444 = vmatpush1.xpose.msra.mxu0 0.0
    %1445 = vmatprep.subr.mxu0 0.0
    %1446 = vmatpush1.xpose.msra.mxu0 0.0
    %1447 = vmatprep.subr.mxu0 0.0
    %1448 = vmatpush1.xpose.msra.mxu0 0.0
    %1449 = vmatprep.subr.mxu0 0.0
    %1450 = vmatpush1.xpose.msra.mxu0 0.0
    %1451 = vmatprep.subr.mxu0 0.0
    %1452 = vmatpush1.xpose.msra.mxu0 0.0
    %1453 = vmatprep.subr.mxu0 0.0
    %1454 = vmatpush1.xpose.msra.mxu0 0.0
    %1455 = vmatprep.subr.mxu0 0.0
    %1456 = vmatpush1.xpose.msra.mxu0 0.0
    %1457 = vmatprep.subr.mxu0 0.0
    %1458 = vmatpush1.xpose.msra.mxu0 0.0
    %1459 = vmatprep.subr.mxu0 0.0
    %1460 = vmatpush1.xpose.msra.mxu0 0.0
    %1461 = vmatprep.subr.mxu0 0.0
    %1462 = vmatpush1.xpose.msra.mxu0 %v1429
    %1463 = vmatprep.subr.mxu0 0.0
    %1464 = vmatpush2.xpose.msra.mxu0 0.0
    %1465 = vmatprep.subr.mxu0 0.0
    %1466 = vmatpush2.xpose.msra.mxu0 0.0
    %1467 = vmatprep.subr.mxu0 0.0
    %1468 = vmatpush2.xpose.msra.mxu0 0.0
    %1469 = vmatprep.subr.mxu0 0.0
    %1470 = vmatpush2.xpose.msra.mxu0 0.0
    %1471 = vmatprep.subr.mxu0 0.0
    %1472 = vmatpush2.xpose.msra.mxu0 0.0
    %1473 = vmatprep.subr.mxu0 0.0
    %1474 = vmatpush2.xpose.msra.mxu0 0.0
    %1475 = vmatprep.subr.mxu0 0.0
    %1476 = vmatpush2.xpose.msra.mxu0 0.0
    %1477 = vmatprep.subr.mxu0 0.0
    %1478 = vmatpush2.xpose.msra.mxu0 0.0
    %1479 = vmatprep.subr.mxu0 0.0
    %1480 = vmatpush2.xpose.msra.mxu0 0.0
    %1481 = vmatprep.subr.mxu0 0.0
    %1482 = vmatpush2.xpose.msra.mxu0 0.0
    %1483 = vmatprep.subr.mxu0 0.0
    %1484 = vmatpush2.xpose.msra.mxu0 0.0
    %1485 = vmatprep.subr.mxu0 0.0
    %1486 = vmatpush2.xpose.msra.mxu0 0.0
    %1487 = vmatprep.subr.mxu0 0.0
    %1488 = vmatpush2.xpose.msra.mxu0 0.0
    %1489 = vmatprep.subr.mxu0 0.0
    %1490 = vmatpush2.xpose.msra.mxu0 0.0
    %1491 = vmatprep.subr.mxu0 0.0
    %1492 = vmatpush2.xpose.msra.mxu0 0.0
    %1493 = vmatprep.subr.mxu0 0.0
    %1494 = vmatpush2.xpose.msra.mxu0 0.0
    %1495 = vmatprep.mubr.f32.mxu0 0.0
    %1496 = vmatmul.mubr.f32.gmra.mxu0 %v1427
    %v1497 = vpop.f32.mrf.mxu0
    %v1498 = vadd.f32 0.0, %v1497
    %v1499 = vpop.f32.mrf.mxu0
    %1500 = vdwg.mxu0
    %v1501 = vmul.f32 %v1498, 0.25
    %v1502 = vsel %vm495, %v1501, -inf
    %1503 = vmax.xlane.f32.xlu0 %v1502
    %v1504 = vpop.xlane.xlu0 %1503
    %v1505 = vsub.f32 %v1501, %v1504
    %v1506 = vmul.f32 %v1505, 1.442695
    %v1507 = vpow.pop %v1506
    %v1508 = vsel %vm495, %v1507, 0.0
    %1509 = vadd.xlane.f32.xlu0 %v1508
    %v1510 = vpop.xlane.xlu0 %1509
    %v1511 = vrcp.pop %v1510
    %1512 = vrot.lane.b32.xlu0 %v414, 96
    %v1513 = vpop.permute.xlu0 %1512
    %v1516 = vsel %vm495, %v1507, 0
    %1518 = vmatprep.subr.mxu0 0.0
    %1519 = vmatpush1.msra.mxu0 0.0
    %1520 = vmatprep.subr.mxu0 0.0
    %1521 = vmatpush1.msra.mxu0 0.0
    %1522 = vmatprep.subr.mxu0 0.0
    %1523 = vmatpush1.msra.mxu0 0.0
    %1524 = vmatprep.subr.mxu0 0.0
    %1525 = vmatpush1.msra.mxu0 0.0
    %1526 = vmatprep.subr.mxu0 0.0
    %1527 = vmatpush1.msra.mxu0 0.0
    %1528 = vmatprep.subr.mxu0 0.0
    %1529 = vmatpush1.msra.mxu0 0.0
    %1530 = vmatprep.subr.mxu0 0.0
    %1531 = vmatpush1.msra.mxu0 0.0
    %1532 = vmatprep.subr.mxu0 0.0
    %1533 = vmatpush1.msra.mxu0 0.0
    %1534 = vmatprep.subr.mxu0 0.0
    %1535 = vmatpush1.msra.mxu0 0.0
    %1536 = vmatprep.subr.mxu0 0.0
    %1537 = vmatpush1.msra.mxu0 0.0
    %1538 = vmatprep.subr.mxu0 0.0
    %1539 = vmatpush1.msra.mxu0 0.0
    %1540 = vmatprep.subr.mxu0 0.0
    %1541 = vmatpush1.msra.mxu0 0.0
    %1542 = vmatprep.subr.mxu0 0.0
    %1543 = vmatpush1.msra.mxu0 0.0
    %1544 = vmatprep.subr.mxu0 0.0
    %1545 = vmatpush1.msra.mxu0 0.0
    %1546 = vmatprep.subr.mxu0 0.0
    %1547 = vmatpush1.msra.mxu0 0.0
    %1548 = vmatprep.subr.mxu0 0.0
    %1549 = vmatpush1.msra.mxu0 %v1513
    %1550 = vmatprep.subr.mxu0 0.0
    %1551 = vmatpush2.msra.mxu0 0.0
    %1552 = vmatprep.subr.mxu0 0.0
    %1553 = vmatpush2.msra.mxu0 0.0
    %1554 = vmatprep.subr.mxu0 0.0
    %1555 = vmatpush2.msra.mxu0 0.0
    %1556 = vmatprep.subr.mxu0 0.0
    %1557 = vmatpush2.msra.mxu0 0.0
    %1558 = vmatprep.subr.mxu0 0.0
    %1559 = vmatpush2.msra.mxu0 0.0
    %1560 = vmatprep.subr.mxu0 0.0
    %1561 = vmatpush2.msra.mxu0 0.0
    %1562 = vmatprep.subr.mxu0 0.0
    %1563 = vmatpush2.msra.mxu0 0.0
    %1564 = vmatprep.subr.mxu0 0.0
    %1565 = vmatpush2.msra.mxu0 0.0
    %1566 = vmatprep.subr.mxu0 0.0
    %1567 = vmatpush2.msra.mxu0 0.0
    %1568 = vmatprep.subr.mxu0 0.0
    %1569 = vmatpush2.msra.mxu0 0.0
    %1570 = vmatprep.subr.mxu0 0.0
    %1571 = vmatpush2.msra.mxu0 0.0
    %1572 = vmatprep.subr.mxu0 0.0
    %1573 = vmatpush2.msra.mxu0 0.0
    %1574 = vmatprep.subr.mxu0 0.0
    %1575 = vmatpush2.msra.mxu0 0.0
    %1576 = vmatprep.subr.mxu0 0.0
    %1577 = vmatpush2.msra.mxu0 0.0
    %1578 = vmatprep.subr.mxu0 0.0
    %1579 = vmatpush2.msra.mxu0 0.0
    %1580 = vmatprep.subr.mxu0 0.0
    %1581 = vmatpush2.msra.mxu0 0.0
    %1582 = vmatprep.mubr.f32.mxu0 0.0
    %1583 = vmatmul.mubr.f32.gmra.mxu0 %v1516
    %v1584 = vpop.f32.mrf.mxu0
    %v1585 = vadd.f32 0.0, %v1584
    %v1586 = vpop.f32.mrf.mxu0
    %1587 = vdwg.mxu0
    %v1588 = vmul.f32 %v1585, %v1511
    %1589 = vrot.lane.b32.xlu0 %v230, 80
    %v1590 = vpop.permute.xlu0 %1589
    %1591 = vrot.lane.b32.xlu0 %v322, 80
    %v1592 = vpop.permute.xlu0 %1591
    %v1593 = vsel %vm417, %v1590, 0
    %v1595 = vsel %vm417, %v1592, 0
    %1597 = vmatprep.subr.mxu0 0.0
    %1598 = vmatpush1.xpose.msra.mxu0 0.0
    %1599 = vmatprep.subr.mxu0 0.0
    %1600 = vmatpush1.xpose.msra.mxu0 0.0
    %1601 = vmatprep.subr.mxu0 0.0
    %1602 = vmatpush1.xpose.msra.mxu0 0.0
    %1603 = vmatprep.subr.mxu0 0.0
    %1604 = vmatpush1.xpose.msra.mxu0 0.0
    %1605 = vmatprep.subr.mxu0 0.0
    %1606 = vmatpush1.xpose.msra.mxu0 0.0
    %1607 = vmatprep.subr.mxu0 0.0
    %1608 = vmatpush1.xpose.msra.mxu0 0.0
    %1609 = vmatprep.subr.mxu0 0.0
    %1610 = vmatpush1.xpose.msra.mxu0 0.0
    %1611 = vmatprep.subr.mxu0 0.0
    %1612 = vmatpush1.xpose.msra.mxu0 0.0
    %1613 = vmatprep.subr.mxu0 0.0
    %1614 = vmatpush1.xpose.msra.mxu0 0.0
    %1615 = vmatprep.subr.mxu0 0.0
    %1616 = vmatpush1.xpose.msra.mxu0 0.0
    %1617 = vmatprep.subr.mxu0 0.0
    %1618 = vmatpush1.xpose.msra.mxu0 0.0
    %1619 = vmatprep.subr.mxu0 0.0
    %1620 = vmatpush1.xpose.msra.mxu0 0.0
    %1621 = vmatprep.subr.mxu0 0.0
    %1622 = vmatpush1.xpose.msra.mxu0 0.0
    %1623 = vmatprep.subr.mxu0 0.0
    %1624 = vmatpush1.xpose.msra.mxu0 0.0
    %1625 = vmatprep.subr.mxu0 0.0
    %1626 = vmatpush1.xpose.msra.mxu0 0.0
    %1627 = vmatprep.subr.mxu0 0.0
    %1628 = vmatpush1.xpose.msra.mxu0 %v1595
    %1629 = vmatprep.subr.mxu0 0.0
    %1630 = vmatpush2.xpose.msra.mxu0 0.0
    %1631 = vmatprep.subr.mxu0 0.0
    %1632 = vmatpush2.xpose.msra.mxu0 0.0
    %1633 = vmatprep.subr.mxu0 0.0
    %1634 = vmatpush2.xpose.msra.mxu0 0.0
    %1635 = vmatprep.subr.mxu0 0.0
    %1636 = vmatpush2.xpose.msra.mxu0 0.0
    %1637 = vmatprep.subr.mxu0 0.0
    %1638 = vmatpush2.xpose.msra.mxu0 0.0
    %1639 = vmatprep.subr.mxu0 0.0
    %1640 = vmatpush2.xpose.msra.mxu0 0.0
    %1641 = vmatprep.subr.mxu0 0.0
    %1642 = vmatpush2.xpose.msra.mxu0 0.0
    %1643 = vmatprep.subr.mxu0 0.0
    %1644 = vmatpush2.xpose.msra.mxu0 0.0
    %1645 = vmatprep.subr.mxu0 0.0
    %1646 = vmatpush2.xpose.msra.mxu0 0.0
    %1647 = vmatprep.subr.mxu0 0.0
    %1648 = vmatpush2.xpose.msra.mxu0 0.0
    %1649 = vmatprep.subr.mxu0 0.0
    %1650 = vmatpush2.xpose.msra.mxu0 0.0
    %1651 = vmatprep.subr.mxu0 0.0
    %1652 = vmatpush2.xpose.msra.mxu0 0.0
    %1653 = vmatprep.subr.mxu0 0.0
    %1654 = vmatpush2.xpose.msra.mxu0 0.0
    %1655 = vmatprep.subr.mxu0 0.0
    %1656 = vmatpush2.xpose.msra.mxu0 0.0
    %1657 = vmatprep.subr.mxu0 0.0
    %1658 = vmatpush2.xpose.msra.mxu0 0.0
    %1659 = vmatprep.subr.mxu0 0.0
    %1660 = vmatpush2.xpose.msra.mxu0 0.0
    %1661 = vmatprep.mubr.f32.mxu0 0.0
    %1662 = vmatmul.mubr.f32.gmra.mxu0 %v1593
    %v1663 = vpop.f32.mrf.mxu0
    %v1664 = vadd.f32 0.0, %v1663
    %v1665 = vpop.f32.mrf.mxu0
    %1666 = vdwg.mxu0
    %v1667 = vmul.f32 %v1664, 0.25
    %v1668 = vsel %vm495, %v1667, -inf
    %1669 = vmax.xlane.f32.xlu0 %v1668
    %v1670 = vpop.xlane.xlu0 %1669
    %v1671 = vsub.f32 %v1667, %v1670
    %v1672 = vmul.f32 %v1671, 1.442695
    %v1673 = vpow.pop %v1672
    %v1674 = vsel %vm495, %v1673, 0.0
    %1675 = vadd.xlane.f32.xlu0 %v1674
    %v1676 = vpop.xlane.xlu0 %1675
    %v1677 = vrcp.pop %v1676
    %1678 = vrot.lane.b32.xlu0 %v414, 80
    %v1679 = vpop.permute.xlu0 %1678
    %v1682 = vsel %vm495, %v1673, 0
    %1684 = vmatprep.subr.mxu0 0.0
    %1685 = vmatpush1.msra.mxu0 0.0
    %1686 = vmatprep.subr.mxu0 0.0
    %1687 = vmatpush1.msra.mxu0 0.0
    %1688 = vmatprep.subr.mxu0 0.0
    %1689 = vmatpush1.msra.mxu0 0.0
    %1690 = vmatprep.subr.mxu0 0.0
    %1691 = vmatpush1.msra.mxu0 0.0
    %1692 = vmatprep.subr.mxu0 0.0
    %1693 = vmatpush1.msra.mxu0 0.0
    %1694 = vmatprep.subr.mxu0 0.0
    %1695 = vmatpush1.msra.mxu0 0.0
    %1696 = vmatprep.subr.mxu0 0.0
    %1697 = vmatpush1.msra.mxu0 0.0
    %1698 = vmatprep.subr.mxu0 0.0
    %1699 = vmatpush1.msra.mxu0 0.0
    %1700 = vmatprep.subr.mxu0 0.0
    %1701 = vmatpush1.msra.mxu0 0.0
    %1702 = vmatprep.subr.mxu0 0.0
    %1703 = vmatpush1.msra.mxu0 0.0
    %1704 = vmatprep.subr.mxu0 0.0
    %1705 = vmatpush1.msra.mxu0 0.0
    %1706 = vmatprep.subr.mxu0 0.0
    %1707 = vmatpush1.msra.mxu0 0.0
    %1708 = vmatprep.subr.mxu0 0.0
    %1709 = vmatpush1.msra.mxu0 0.0
    %1710 = vmatprep.subr.mxu0 0.0
    %1711 = vmatpush1.msra.mxu0 0.0
    %1712 = vmatprep.subr.mxu0 0.0
    %1713 = vmatpush1.msra.mxu0 0.0
    %1714 = vmatprep.subr.mxu0 0.0
    %1715 = vmatpush1.msra.mxu0 %v1679
    %1716 = vmatprep.subr.mxu0 0.0
    %1717 = vmatpush2.msra.mxu0 0.0
    %1718 = vmatprep.subr.mxu0 0.0
    %1719 = vmatpush2.msra.mxu0 0.0
    %1720 = vmatprep.subr.mxu0 0.0
    %1721 = vmatpush2.msra.mxu0 0.0
    %1722 = vmatprep.subr.mxu0 0.0
    %1723 = vmatpush2.msra.mxu0 0.0
    %1724 = vmatprep.subr.mxu0 0.0
    %1725 = vmatpush2.msra.mxu0 0.0
    %1726 = vmatprep.subr.mxu0 0.0
    %1727 = vmatpush2.msra.mxu0 0.0
    %1728 = vmatprep.subr.mxu0 0.0
    %1729 = vmatpush2.msra.mxu0 0.0
    %1730 = vmatprep.subr.mxu0 0.0
    %1731 = vmatpush2.msra.mxu0 0.0
    %1732 = vmatprep.subr.mxu0 0.0
    %1733 = vmatpush2.msra.mxu0 0.0
    %1734 = vmatprep.subr.mxu0 0.0
    %1735 = vmatpush2.msra.mxu0 0.0
    %1736 = vmatprep.subr.mxu0 0.0
    %1737 = vmatpush2.msra.mxu0 0.0
    %1738 = vmatprep.subr.mxu0 0.0
    %1739 = vmatpush2.msra.mxu0 0.0
    %1740 = vmatprep.subr.mxu0 0.0
    %1741 = vmatpush2.msra.mxu0 0.0
    %1742 = vmatprep.subr.mxu0 0.0
    %1743 = vmatpush2.msra.mxu0 0.0
    %1744 = vmatprep.subr.mxu0 0.0
    %1745 = vmatpush2.msra.mxu0 0.0
    %1746 = vmatprep.subr.mxu0 0.0
    %1747 = vmatpush2.msra.mxu0 0.0
    %1748 = vmatprep.mubr.f32.mxu0 0.0
    %1749 = vmatmul.mubr.f32.gmra.mxu0 %v1682
    %v1750 = vpop.f32.mrf.mxu0
    %v1751 = vadd.f32 0.0, %v1750
    %v1752 = vpop.f32.mrf.mxu0
    %1753 = vdwg.mxu0
    %v1754 = vmul.f32 %v1751, %v1677
    %1756 = vrot.lane.b32.xlu0 %v1422, 16
    %v1757 = vpop.permute.xlu0 %1756
    %1760 = vrot.lane.b32.xlu0 %v1588, 32
    %v1761 = vpop.permute.xlu0 %1760
    %1764 = vrot.lane.b32.xlu0 %v1754, 48
    %v1765 = vpop.permute.xlu0 %1764
    %v1767 = vsel %vm417, %v1255, %v1757
    %v1768 = vsel %vm151, %v1767, %v1761
    %v1769 = vsel %vm1093, %v1768, %v1765
    %v1770 = vld [vmem:[#allocation13] sm:$0xff]
    %v1771 = vld [vmem:[#allocation13 + $0x8] sm:$0xff]
    %v1772 = vld [vmem:[#allocation13 + $0x10] sm:$0xff]
    %v1773 = vld [vmem:[#allocation13 + $0x18] sm:$0xff]
    %v1774 = vld [vmem:[#allocation13 + $0x20] sm:$0xff]
    %v1775 = vld [vmem:[#allocation13 + $0x28] sm:$0xff]
    %v1776 = vld [vmem:[#allocation13 + $0x30] sm:$0xff]
    %v1777 = vld [vmem:[#allocation13 + $0x38] sm:$0xff]
    %v1778 = vld [vmem:[%s10] sm:$0x1]
    %v1780 = vlaneseq
    %v1781 = vshrl.u32 %v1780, 7
    %v1782 = vsub.s32 0, %v1781
    %v1783 = vrot.slane %v1778, %v1782
    %vm1785 = vcmask 523264
    %v1787 = vsel %vm1785, %v1094, 0
    %v1790 = vsel %vm1785, %v1769, 0
    %1792 = vmatprep.subr.mxu0 0.0
    %1793 = vmatpush1.msra.mxu0 0.0
    %1794 = vmatprep.subr.mxu0 0.0
    %1795 = vmatpush1.msra.mxu0 0.0
    %1796 = vmatprep.subr.mxu0 0.0
    %1797 = vmatpush1.msra.mxu0 0.0
    %1798 = vmatprep.subr.mxu0 0.0
    %1799 = vmatpush1.msra.mxu0 0.0
    %1800 = vmatprep.subr.mxu0 0.0
    %1801 = vmatpush1.msra.mxu0 0.0
    %1802 = vmatprep.subr.mxu0 0.0
    %1803 = vmatpush1.msra.mxu0 0.0
    %1804 = vmatprep.subr.mxu0 0.0
    %1805 = vmatpush1.msra.mxu0 0.0
    %1806 = vmatprep.subr.mxu0 0.0
    %1807 = vmatpush1.msra.mxu0 0.0
    %1808 = vmatprep.subr.mxu0 0.0
    %1809 = vmatpush1.msra.mxu0 %v1777
    %1810 = vmatprep.subr.mxu0 0.0
    %1811 = vmatpush1.msra.mxu0 %v1776
    %1812 = vmatprep.subr.mxu0 0.0
    %1813 = vmatpush1.msra.mxu0 %v1775
    %1814 = vmatprep.subr.mxu0 0.0
    %1815 = vmatpush1.msra.mxu0 %v1774
    %1816 = vmatprep.subr.mxu0 0.0
    %1817 = vmatpush1.msra.mxu0 %v1773
    %1818 = vmatprep.subr.mxu0 0.0
    %1819 = vmatpush1.msra.mxu0 %v1772
    %1820 = vmatprep.subr.mxu0 0.0
    %1821 = vmatpush1.msra.mxu0 %v1771
    %1822 = vmatprep.subr.mxu0 0.0
    %1823 = vmatpush1.msra.mxu0 %v1770
    %1824 = vmatprep.subr.mxu0 0.0
    %1825 = vmatpush2.msra.mxu0 0.0
    %1826 = vmatprep.subr.mxu0 0.0
    %1827 = vmatpush2.msra.mxu0 0.0
    %1828 = vmatprep.subr.mxu0 0.0
    %1829 = vmatpush2.msra.mxu0 0.0
    %1830 = vmatprep.subr.mxu0 0.0
    %1831 = vmatpush2.msra.mxu0 0.0
    %1832 = vmatprep.subr.mxu0 0.0
    %1833 = vmatpush2.msra.mxu0 0.0
    %1834 = vmatprep.subr.mxu0 0.0
    %1835 = vmatpush2.msra.mxu0 0.0
    %1836 = vmatprep.subr.mxu0 0.0
    %1837 = vmatpush2.msra.mxu0 0.0
    %1838 = vmatprep.subr.mxu0 0.0
    %1839 = vmatpush2.msra.mxu0 0.0
    %1840 = vmatprep.subr.mxu0 0.0
    %1841 = vmatpush2.msra.mxu0 0.0
    %1842 = vmatprep.subr.mxu0 0.0
    %1843 = vmatpush2.msra.mxu0 0.0
    %1844 = vmatprep.subr.mxu0 0.0
    %1845 = vmatpush2.msra.mxu0 0.0
    %1846 = vmatprep.subr.mxu0 0.0
    %1847 = vmatpush2.msra.mxu0 0.0
    %1848 = vmatprep.subr.mxu0 0.0
    %1849 = vmatpush2.msra.mxu0 0.0
    %1850 = vmatprep.subr.mxu0 0.0
    %1851 = vmatpush2.msra.mxu0 0.0
    %1852 = vmatprep.subr.mxu0 0.0
    %1853 = vmatpush2.msra.mxu0 0.0
    %1854 = vmatprep.subr.mxu0 0.0
    %1855 = vmatpush2.msra.mxu0 0.0
    %1856 = vmatprep.mubr.f32.mxu0 0.0
    %1857 = vmatmul.mubr.f32.gmra.mxu0 %v1787
    %v1858 = vpop.f32.mrf.mxu0
    %v1859 = vadd.f32 %v1783, %v1858
    %v1860 = vpop.f32.mrf.mxu0
    %1861 = vmatprep.mubr.f32.mxu0 0.0
    %1862 = vmatmul.mubr.f32.gmra.mxu0 %v1790
    %v1863 = vpop.f32.mrf.mxu0
    %v1864 = vadd.f32 %v1783, %v1863
    %v1865 = vpop.f32.mrf.mxu0
    %1866 = vdwg.mxu0
    %1867 = vst [vmem:[#allocation14] sm:$0xff] %v1859
    %1868 = vst [vmem:[#allocation14 + $0x8] sm:$0xff] %v1864
    // Predicated region
    $region74: #{tpu_custom_call.1} parent=1 // pred_check
      _
    $region75: #{tpu_custom_call.1} parent=1 // pred_check_branch
      %1870 = sbr.rel (0) target = $region77
    $region76: #{tpu_custom_call.1} parent=1 // pred_region
      %s1872 = ssub.s32 256, 256
      %1873 = vsyncadd [#allocation4], %s1872
      %s1874 = sshll.u32 [#allocation14], 4
      %s1875 = int_to_ptr.vmem [resolvable:$true] %s1874
      %1880 = dma.vmem_to_hbm [thread:$0]  %s1875, 256, %s11, [#allocation4], 128, 128, 8
    $region77: #{tpu_custom_call.1} parent=1 // pred_fallthru
      _
    // Predicated region
    $region78: #{tpu_custom_call.1} parent=1 // pred_check
      _
    $region79: #{tpu_custom_call.1} parent=1 // pred_check_branch
      %1882 = sbr.rel (0) target = $region81
    $region80: #{tpu_custom_call.1} parent=1 // pred_region
      %1883 = dma.done [#allocation4], 256
    $region81: #{tpu_custom_call.1} parent=1 // pred_fallthru
      _
    %1884 = vsyncpa [#allocation3], 1
    %1885 = vsyncpa [#allocation6], 1
    %1886 = vsyncpa [#allocation9], 1
    %1887 = vsyncpa [#allocation12], 1
    %1888 = vsyncpa [#allocation4], 1

</llo_original>
